<compile_context>
chip_gen: v7x
topology: tpu7x:2x2x1
jax: 0.10.0
libtpu: 0.0.40
codegen_flags: <defaults>
</compile_context>

<pallas_src>
import jax
import jax.numpy as jnp
from jax.experimental import pallas as pl
from jax.experimental.pallas import tpu as pltpu


def _round_up(x, m):
    return (x + m - 1) // m * m


def _pad_gate_blocks(m, H, Hp, pad_cols_to=None):
    """Pad a PyTorch stacked-gate tensor [3H, ...] -> [3Hp, ...], zero-padding each
    (r, z, n) block independently so lane-aligned slices select the right gate."""
    pads = [(0, Hp - H)] + [(0, 0)] * (m.ndim - 1)
    blocks = [jnp.pad(m[g * H:(g + 1) * H], pads) for g in range(3)]
    out = jnp.concatenate(blocks, axis=0)
    if pad_cols_to is not None:
        out = jnp.pad(out, [(0, 0), (0, pad_cols_to - out.shape[1])])
    return out


def strategic_rnn_forward(latent_seq, params, hidden_state=None, *, time_chunk=32):
    """latent_seq: [B, T, latent_dim]; hidden_state: [1, B, H] or None.
    Returns (output_seq [B, T, H], final_hidden [1, B, H]) — PyTorch GRU semantics."""
    B, T, D = latent_seq.shape
    w_ih, w_hh = params["w_ih"], params["w_hh"]          # [3H, D], [3H, H]
    b_ih, b_hh = params["b_ih"], params["b_hh"]          # [3H], [3H]
    H = w_hh.shape[1]

    # ---- tile-size padding -------------------------------------------------
    Bp = _round_up(max(B, 8), 8)          # sublane tile
    Hp = _round_up(max(H, 128), 128)      # lane tile
    TC = max(1, min(time_chunk, T))       # chunked, statically-unrolled time axis
    Tp = _round_up(T, TC)
    n_chunks = Tp // TC

    # ---- one-time parameter packing (all f32) --------------------------------
    w_ih_t = _pad_gate_blocks(w_ih, H, Hp).T.astype(jnp.float32)                  # [D, 3Hp]
    w_hh_t = _pad_gate_blocks(w_hh, H, Hp, pad_cols_to=Hp).T.astype(jnp.float32)  # [Hp, 3Hp]

    # Fold b_hr / b_hz into b_ir / b_iz (added once in the hoisted projection);
    # keep only b_hn for the kernel (it must be applied before the r multiply).
    b_comb = jnp.concatenate([b_ih[:2 * H] + b_hh[:2 * H], b_ih[2 * H:]])
    b_comb_p = _pad_gate_blocks(b_comb, H, Hp).astype(jnp.float32)                # [3Hp]
    b_hn_p = jnp.pad(b_hh[2 * H:3 * H], (0, Hp - H)).astype(jnp.float32)[None, :]  # [1, Hp]

    if hidden_state is None:
        h0 = jnp.zeros((Bp, Hp), jnp.float32)
    else:
        h0 = jnp.pad(hidden_state[0].astype(jnp.float32),
                     ((0, Bp - B), (0, Hp - H)))                                  # [Bp, Hp]

    # ---- hoisted input projection -------------------------------------------
    # Transpose the SMALL x tensor to time-major, then one plain f32 matmul;
    # gi comes out already in the kernel's [Tp, Bp, 3Hp] layout (no relayout of
    # the large intermediate).
    x_p = jnp.pad(latent_seq.astype(jnp.float32),
                  ((0, Bp - B), (0, Tp - T), (0, 0)))                             # [Bp, Tp, D]
    x_tm = jnp.transpose(x_p, (1, 0, 2)).reshape(Tp * Bp, D)                      # [Tp*Bp, D]
    gi = (jnp.dot(x_tm, w_ih_t, preferred_element_type=jnp.float32)
          + b_comb_p[None, :]).reshape(Tp, Bp, 3 * Hp)                            # [Tp, Bp, 3Hp]

    # ---- serial recurrence kernel -------------------------------------------
    def gru_kernel(gi_ref, w_hh_ref, b_hn_ref, h0_ref, out_ref, h_scratch):
        c = pl.program_id(0)

        @pl.when(c == 0)
        def _():
            h_scratch[...] = h0_ref[...]

        h = h_scratch[...]                                   # [Bp, Hp] f32
        w = w_hh_ref[...]                                    # [Hp, 3Hp] f32 (resident; hoisted)
        # Hoisted bias broadcast: once per chunk, not once per unrolled step.
        b_hn = jnp.broadcast_to(b_hn_ref[...], (Bp, Hp))     # [Bp, Hp]

        # Statically unrolled time loop inside the chunk (amortizes per-grid-step
        # overhead; all indexing is static so every load/store is a full tile).
        # TODO(synk): stage W_hh in the MXU weight registers across the chunk
        # (pltpu.matmul_push_rhs / matmul_acc_lhs / matmul_pop) once a bundle
        # dump confirms the RHS is being re-pushed for every jnp.dot below.
        for i in range(TC):
            gi_t = gi_ref[i]                                 # [Bp, 3Hp] f32
            gh = jnp.dot(h, w, preferred_element_type=jnp.float32)   # [Bp, 3Hp]
            r = jax.nn.sigmoid(gi_t[:, 0:Hp] + gh[:, 0:Hp])
            z = jax.nn.sigmoid(gi_t[:, Hp:2 * Hp] + gh[:, Hp:2 * Hp])
            n = jnp.tanh(gi_t[:, 2 * Hp:] + r * (gh[:, 2 * Hp:] + b_hn))
            h = (1.0 - z) * n + z * h
            out_ref[i] = h                                   # full (8,128)-tile store

        h_scratch[...] = h

    # ---- explicit VMEM budget (gi/out double buffers + resident blocks) -------
    f32b = 4
    vmem_needed = (
        2 * TC * Bp * 3 * Hp * f32b        # gi chunk, double-buffered
        + 2 * TC * Bp * Hp * f32b          # out chunk, double-buffered
        + 2 * Hp * 3 * Hp * f32b           # W_hh^T (default double-buffered)
        + 2 * 8 * Hp * f32b                # b_hn (sublane-padded)
        + 2 * Bp * Hp * f32b               # h0
        + Bp * Hp * f32b                   # h scratch
    )
    vmem_limit = min(max(int(1.5 * vmem_needed), 32 * 1024 * 1024), 128 * 1024 * 1024)

    out_tm = pl.pallas_call(
        gru_kernel,
        out_shape=jax.ShapeDtypeStruct((Tp, Bp, Hp), jnp.float32),
        grid_spec=pltpu.PrefetchScalarGridSpec(
            num_scalar_prefetch=0,
            grid=(n_chunks,),
            in_specs=[
                pl.BlockSpec((TC, Bp, 3 * Hp), lambda c: (c, 0, 0)),   # gi chunk
                pl.BlockSpec((Hp, 3 * Hp), lambda c: (0, 0)),          # W_hh^T (resident)
                pl.BlockSpec((1, Hp), lambda c: (0, 0)),               # b_hn   (resident)
                pl.BlockSpec((Bp, Hp), lambda c: (0, 0)),              # h0     (resident)
            ],
            out_specs=pl.BlockSpec((TC, Bp, Hp), lambda c: (c, 0, 0)),
            scratch_shapes=[pltpu.VMEM((Bp, Hp), jnp.float32)],
        ),
        compiler_params=pltpu.CompilerParams(
            dimension_semantics=("arbitrary",),   # time axis is inherently serial
            vmem_limit_bytes=vmem_limit),
    )(gi, w_hh_t, b_hn_p, h0)

    # unpad and return batch-major, PyTorch-style outputs
    out_seq = jnp.transpose(out_tm[:T, :B, :H], (1, 0, 2))   # [B, T, H]
    final_hidden = out_tm[T - 1, :B, :H][None, :, :]         # [1, B, H] (== last output)
    return out_seq, final_hidden


def init_gru_params(key, latent_dim, hidden_dim):
    """nn.GRU-shaped params, uniform(-1/sqrt(H), 1/sqrt(H))."""
    k = 1.0 / jnp.sqrt(jnp.float32(hidden_dim))
    k_ih, k_hh, k_bi, k_bh = jax.random.split(key, 4)
    return {
        "w_ih": jax.random.uniform(k_ih, (3 * hidden_dim, latent_dim), jnp.float32, -k, k),
        "w_hh": jax.random.uniform(k_hh, (3 * hidden_dim, hidden_dim), jnp.float32, -k, k),
        "b_ih": jax.random.uniform(k_bi, (3 * hidden_dim,), jnp.float32, -k, k),
        "b_hh": jax.random.uniform(k_bh, (3 * hidden_dim,), jnp.float32, -k, k),
    }


def gru_reference(latent_seq, params, h0):
    """Pure-JAX f32 reference (PyTorch r/z/n gate order and b_hn placement)."""
    w_ih, w_hh = params["w_ih"], params["w_hh"]
    b_ih, b_hh = params["b_ih"], params["b_hh"]
    H = w_hh.shape[1]
    w_ih_t = w_ih.T.astype(jnp.float32)
    w_hh_t = w_hh.T.astype(jnp.float32)

    def step(h, x_t):
        gi = jnp.dot(x_t, w_ih_t, preferred_element_type=jnp.float32) + b_ih
        gh = jnp.dot(h, w_hh_t, preferred_element_type=jnp.float32) + b_hh
        i_r, i_z, i_n = gi[:, :H], gi[:, H:2 * H], gi[:, 2 * H:]
        h_r, h_z, h_n = gh[:, :H], gh[:, H:2 * H], gh[:, 2 * H:]
        r = jax.nn.sigmoid(i_r + h_r)
        z = jax.nn.sigmoid(i_z + h_z)
        n = jnp.tanh(i_n + r * h_n)
        h_new = (1.0 - z) * n + z * h
        return h_new, h_new

    x_tm = jnp.transpose(latent_seq, (1, 0, 2))
    h_last, out_tm = jax.lax.scan(step, h0.astype(jnp.float32), x_tm)
    return jnp.transpose(out_tm, (1, 0, 2)), h_last[None]


if __name__ == "__main__":
    B, T, latent_dim, hidden_dim = 2, 8, 32, 32

    key = jax.random.PRNGKey(0)
    k_param, k_x, k_h = jax.random.split(key, 3)

    params = init_gru_params(k_param, latent_dim, hidden_dim)
    latent_seq = jax.random.normal(k_x, (B, T, latent_dim), jnp.float32)
    hidden_state = jax.random.normal(k_h, (1, B, hidden_dim), jnp.float32)

    out_seq, final_hidden = strategic_rnn_forward(latent_seq, params, hidden_state)
    out_seq = jax.block_until_ready(out_seq)
    final_hidden = jax.block_until_ready(final_hidden)

    ref_seq, ref_hidden = gru_reference(latent_seq, params, hidden_state[0])
    assert out_seq.shape == (B, T, hidden_dim)
    assert final_hidden.shape == (1, B, hidden_dim)
    assert jnp.allclose(out_seq, ref_seq, atol=1e-3, rtol=1e-3)
    assert jnp.allclose(final_hidden, ref_hidden, atol=1e-3, rtol=1e-3)

    print("KERNEL_OK")
</pallas_src>

<mosaic_0001>
module attributes {stable_mosaic.version = 11 : i64} {
  func.func @gru_kernel(%arg0: i32, %arg1: memref<8x8x384xf32, #tpu.memory_space<vmem>>, %arg2: memref<128x384xf32, #tpu.memory_space<vmem>>, %arg3: memref<1x128xf32, #tpu.memory_space<vmem>>, %arg4: memref<8x128xf32, #tpu.memory_space<vmem>>, %arg5: memref<8x8x128xf32, #tpu.memory_space<vmem>>, %arg6: memref<8x128xf32, #tpu.memory_space<vmem>>) attributes {dimension_semantics = [#tpu.dimension_semantics<arbitrary>], iteration_bounds = array<i64: 1>, scalar_prefetch = 0 : i64, scratch_operands = 1 : i64, tpu.core_type = #tpu.core_type<tc>, window_params = [{transform_indices = @transform_0, window_bounds = array<i64: 8, 8, 384>}, {pipeline_mode = #tpu.pipeline_mode<synchronous>, transform_indices = @transform_1, window_bounds = array<i64: 128, 384>}, {pipeline_mode = #tpu.pipeline_mode<synchronous>, transform_indices = @transform_2, window_bounds = array<i64: 1, 128>}, {pipeline_mode = #tpu.pipeline_mode<synchronous>, transform_indices = @transform_3, window_bounds = array<i64: 8, 128>}, {transform_indices = @transform_4, window_bounds = array<i64: 8, 8, 128>}]} {
    %c0_i32 = arith.constant 0 : i32
    %0 = arith.cmpi eq, %arg0, %c0_i32 : i32
    %1 = arith.extui %0 : i1 to i32
    %c0_i32_0 = arith.constant 0 : i32
    %2 = arith.cmpi ne, %1, %c0_i32_0 : i32
    scf.if %2 {
      %c0_80 = arith.constant 0 : index
      %c0_81 = arith.constant 0 : index
      %273 = vector.load %arg4[%c0_80, %c0_81] : memref<8x128xf32, #tpu.memory_space<vmem>>, vector<8x128xf32>
      %c0_82 = arith.constant 0 : index
      %c0_83 = arith.constant 0 : index
      %274 = vector.load %arg6[%c0_82, %c0_83] : memref<8x128xf32, #tpu.memory_space<vmem>>, vector<8x128xf32>
      tpu.vector_store %arg6[%c0_82, %c0_83], %273 {strides = array<i32>} : memref<8x128xf32, #tpu.memory_space<vmem>>, vector<8x128xf32>,
    } else {
    }
    %c0 = arith.constant 0 : index
    %c0_1 = arith.constant 0 : index
    %3 = vector.load %arg6[%c0, %c0_1] : memref<8x128xf32, #tpu.memory_space<vmem>>, vector<8x128xf32>
    %c0_2 = arith.constant 0 : index
    %c0_3 = arith.constant 0 : index
    %4 = vector.load %arg2[%c0_2, %c0_3] : memref<128x384xf32, #tpu.memory_space<vmem>>, vector<128x384xf32>
    %c0_4 = arith.constant 0 : index
    %c0_5 = arith.constant 0 : index
    %5 = vector.load %arg3[%c0_4, %c0_5] : memref<1x128xf32, #tpu.memory_space<vmem>>, vector<1x128xf32>
    %6 = vector.shape_cast %5 : vector<1x128xf32> to vector<1x128xf32>
    %7 = vector.broadcast %6 : vector<1x128xf32> to vector<8x128xf32>
    %c0_6 = arith.constant 0 : index
    %c0_7 = arith.constant 0 : index
    %c0_8 = arith.constant 0 : index
    %8 = vector.load %arg1[%c0_6, %c0_7, %c0_8] : memref<8x8x384xf32, #tpu.memory_space<vmem>>, vector<1x8x384xf32>
    %9 = vector.shape_cast %8 : vector<1x8x384xf32> to vector<8x384xf32>
    %cst = arith.constant dense<0.000000e+00> : vector<8x384xf32>
    %10 = tpu.matmul %3, %4, %cst {dimension_numbers = #tpu.dot_dimension_numbers<[1], [0], [0], [1], [0, 0, 1, 1], [], []>} : vector<8x128xf32>, vector<128x384xf32>, vector<8x384xf32> -> vector<8x384xf32>
    %11 = vector.extract_strided_slice %9 {offsets = [0, 0], sizes = [8, 128], strides = [1, 1]} : vector<8x384xf32> to vector<8x128xf32>
    %12 = vector.extract_strided_slice %10 {offsets = [0, 0], sizes = [8, 128], strides = [1, 1]} : vector<8x384xf32> to vector<8x128xf32>
    %13 = arith.addf %11, %12 : vector<8x128xf32>
    %14 = arith.negf %13 : vector<8x128xf32>
    %15 = math.exp %14 : vector<8x128xf32>
    %cst_9 = arith.constant 1.000000e+00 : f32
    %16 = vector.broadcast %cst_9 : f32 to vector<8x128xf32>
    %17 = arith.addf %16, %15 : vector<8x128xf32>
    %18 = arith.divf %16, %17 : vector<8x128xf32>
    %19 = vector.extract_strided_slice %9 {offsets = [0, 128], sizes = [8, 128], strides = [1, 1]} : vector<8x384xf32> to vector<8x128xf32>
    %20 = vector.extract_strided_slice %10 {offsets = [0, 128], sizes = [8, 128], strides = [1, 1]} : vector<8x384xf32> to vector<8x128xf32>
    %21 = arith.addf %19, %20 : vector<8x128xf32>
    %22 = arith.negf %21 : vector<8x128xf32>
    %23 = math.exp %22 : vector<8x128xf32>
    %cst_10 = arith.constant 1.000000e+00 : f32
    %24 = vector.broadcast %cst_10 : f32 to vector<8x128xf32>
    %25 = arith.addf %24, %23 : vector<8x128xf32>
    %26 = arith.divf %24, %25 : vector<8x128xf32>
    %27 = vector.extract_strided_slice %9 {offsets = [0, 256], sizes = [8, 128], strides = [1, 1]} : vector<8x384xf32> to vector<8x128xf32>
    %28 = vector.extract_strided_slice %10 {offsets = [0, 256], sizes = [8, 128], strides = [1, 1]} : vector<8x384xf32> to vector<8x128xf32>
    %29 = arith.addf %28, %7 : vector<8x128xf32>
    %30 = arith.mulf %18, %29 : vector<8x128xf32>
    %31 = arith.addf %27, %30 : vector<8x128xf32>
    %32 = math.tanh %31 : vector<8x128xf32>
    %cst_11 = arith.constant 1.000000e+00 : f32
    %33 = vector.broadcast %cst_11 : f32 to vector<8x128xf32>
    %34 = arith.subf %33, %26 : vector<8x128xf32>
    %35 = arith.mulf %34, %32 : vector<8x128xf32>
    %36 = arith.mulf %26, %3 : vector<8x128xf32>
    %37 = arith.addf %35, %36 : vector<8x128xf32>
    %c0_12 = arith.constant 0 : index
    %c0_13 = arith.constant 0 : index
    %c0_14 = arith.constant 0 : index
    %38 = vector.load %arg5[%c0_12, %c0_13, %c0_14] : memref<8x8x128xf32, #tpu.memory_space<vmem>>, vector<1x8x128xf32>
    %39 = vector.shape_cast %38 : vector<1x8x128xf32> to vector<8x128xf32>
    %40 = vector.shape_cast %37 : vector<8x128xf32> to vector<1x8x128xf32>
    tpu.vector_store %arg5[%c0_12, %c0_13, %c0_14], %40 {strides = array<i32>} : memref<8x8x128xf32, #tpu.memory_space<vmem>>, vector<1x8x128xf32>,
    %c1 = arith.constant 1 : index
    %c0_15 = arith.constant 0 : index
    %c0_16 = arith.constant 0 : index
    %41 = vector.load %arg1[%c1, %c0_15, %c0_16] : memref<8x8x384xf32, #tpu.memory_space<vmem>>, vector<1x8x384xf32>
    %42 = vector.shape_cast %41 : vector<1x8x384xf32> to vector<8x384xf32>
    %cst_17 = arith.constant dense<0.000000e+00> : vector<8x384xf32>
    %43 = tpu.matmul %37, %4, %cst_17 {dimension_numbers = #tpu.dot_dimension_numbers<[1], [0], [0], [1], [0, 0, 1, 1], [], []>} : vector<8x128xf32>, vector<128x384xf32>, vector<8x384xf32> -> vector<8x384xf32>
    %44 = vector.extract_strided_slice %42 {offsets = [0, 0], sizes = [8, 128], strides = [1, 1]} : vector<8x384xf32> to vector<8x128xf32>
    %45 = vector.extract_strided_slice %43 {offsets = [0, 0], sizes = [8, 128], strides = [1, 1]} : vector<8x384xf32> to vector<8x128xf32>
    %46 = arith.addf %44, %45 : vector<8x128xf32>
    %47 = arith.negf %46 : vector<8x128xf32>
    %48 = math.exp %47 : vector<8x128xf32>
    %cst_18 = arith.constant 1.000000e+00 : f32
    %49 = vector.broadcast %cst_18 : f32 to vector<8x128xf32>
    %50 = arith.addf %49, %48 : vector<8x128xf32>
    %51 = arith.divf %49, %50 : vector<8x128xf32>
    %52 = vector.extract_strided_slice %42 {offsets = [0, 128], sizes = [8, 128], strides = [1, 1]} : vector<8x384xf32> to vector<8x128xf32>
    %53 = vector.extract_strided_slice %43 {offsets = [0, 128], sizes = [8, 128], strides = [1, 1]} : vector<8x384xf32> to vector<8x128xf32>
    %54 = arith.addf %52, %53 : vector<8x128xf32>
    %55 = arith.negf %54 : vector<8x128xf32>
    %56 = math.exp %55 : vector<8x128xf32>
    %cst_19 = arith.constant 1.000000e+00 : f32
    %57 = vector.broadcast %cst_19 : f32 to vector<8x128xf32>
    %58 = arith.addf %57, %56 : vector<8x128xf32>
    %59 = arith.divf %57, %58 : vector<8x128xf32>
    %60 = vector.extract_strided_slice %42 {offsets = [0, 256], sizes = [8, 128], strides = [1, 1]} : vector<8x384xf32> to vector<8x128xf32>
    %61 = vector.extract_strided_slice %43 {offsets = [0, 256], sizes = [8, 128], strides = [1, 1]} : vector<8x384xf32> to vector<8x128xf32>
    %62 = arith.addf %61, %7 : vector<8x128xf32>
    %63 = arith.mulf %51, %62 : vector<8x128xf32>
    %64 = arith.addf %60, %63 : vector<8x128xf32>
    %65 = math.tanh %64 : vector<8x128xf32>
    %cst_20 = arith.constant 1.000000e+00 : f32
    %66 = vector.broadcast %cst_20 : f32 to vector<8x128xf32>
    %67 = arith.subf %66, %59 : vector<8x128xf32>
    %68 = arith.mulf %67, %65 : vector<8x128xf32>
    %69 = arith.mulf %59, %37 : vector<8x128xf32>
    %70 = arith.addf %68, %69 : vector<8x128xf32>
    %c1_21 = arith.constant 1 : index
    %c0_22 = arith.constant 0 : index
    %c0_23 = arith.constant 0 : index
    %71 = vector.load %arg5[%c1_21, %c0_22, %c0_23] : memref<8x8x128xf32, #tpu.memory_space<vmem>>, vector<1x8x128xf32>
    %72 = vector.shape_cast %71 : vector<1x8x128xf32> to vector<8x128xf32>
    %73 = vector.shape_cast %70 : vector<8x128xf32> to vector<1x8x128xf32>
    tpu.vector_store %arg5[%c1_21, %c0_22, %c0_23], %73 {strides = array<i32>} : memref<8x8x128xf32, #tpu.memory_space<vmem>>, vector<1x8x128xf32>,
    %c2 = arith.constant 2 : index
    %c0_24 = arith.constant 0 : index
    %c0_25 = arith.constant 0 : index
    %74 = vector.load %arg1[%c2, %c0_24, %c0_25] : memref<8x8x384xf32, #tpu.memory_space<vmem>>, vector<1x8x384xf32>
    %75 = vector.shape_cast %74 : vector<1x8x384xf32> to vector<8x384xf32>
    %cst_26 = arith.constant dense<0.000000e+00> : vector<8x384xf32>
    %76 = tpu.matmul %70, %4, %cst_26 {dimension_numbers = #tpu.dot_dimension_numbers<[1], [0], [0], [1], [0, 0, 1, 1], [], []>} : vector<8x128xf32>, vector<128x384xf32>, vector<8x384xf32> -> vector<8x384xf32>
    %77 = vector.extract_strided_slice %75 {offsets = [0, 0], sizes = [8, 128], strides = [1, 1]} : vector<8x384xf32> to vector<8x128xf32>
    %78 = vector.extract_strided_slice %76 {offsets = [0, 0], sizes = [8, 128], strides = [1, 1]} : vector<8x384xf32> to vector<8x128xf32>
    %79 = arith.addf %77, %78 : vector<8x128xf32>
    %80 = arith.negf %79 : vector<8x128xf32>
    %81 = math.exp %80 : vector<8x128xf32>
    %cst_27 = arith.constant 1.000000e+00 : f32
    %82 = vector.broadcast %cst_27 : f32 to vector<8x128xf32>
    %83 = arith.addf %82, %81 : vector<8x128xf32>
    %84 = arith.divf %82, %83 : vector<8x128xf32>
    %85 = vector.extract_strided_slice %75 {offsets = [0, 128], sizes = [8, 128], strides = [1, 1]} : vector<8x384xf32> to vector<8x128xf32>
    %86 = vector.extract_strided_slice %76 {offsets = [0, 128], sizes = [8, 128], strides = [1, 1]} : vector<8x384xf32> to vector<8x128xf32>
    %87 = arith.addf %85, %86 : vector<8x128xf32>
    %88 = arith.negf %87 : vector<8x128xf32>
    %89 = math.exp %88 : vector<8x128xf32>
    %cst_28 = arith.constant 1.000000e+00 : f32
    %90 = vector.broadcast %cst_28 : f32 to vector<8x128xf32>
    %91 = arith.addf %90, %89 : vector<8x128xf32>
    %92 = arith.divf %90, %91 : vector<8x128xf32>
    %93 = vector.extract_strided_slice %75 {offsets = [0, 256], sizes = [8, 128], strides = [1, 1]} : vector<8x384xf32> to vector<8x128xf32>
    %94 = vector.extract_strided_slice %76 {offsets = [0, 256], sizes = [8, 128], strides = [1, 1]} : vector<8x384xf32> to vector<8x128xf32>
    %95 = arith.addf %94, %7 : vector<8x128xf32>
    %96 = arith.mulf %84, %95 : vector<8x128xf32>
    %97 = arith.addf %93, %96 : vector<8x128xf32>
    %98 = math.tanh %97 : vector<8x128xf32>
    %cst_29 = arith.constant 1.000000e+00 : f32
    %99 = vector.broadcast %cst_29 : f32 to vector<8x128xf32>
    %100 = arith.subf %99, %92 : vector<8x128xf32>
    %101 = arith.mulf %100, %98 : vector<8x128xf32>
    %102 = arith.mulf %92, %70 : vector<8x128xf32>
    %103 = arith.addf %101, %102 : vector<8x128xf32>
    %c2_30 = arith.constant 2 : index
    %c0_31 = arith.constant 0 : index
    %c0_32 = arith.constant 0 : index
    %104 = vector.load %arg5[%c2_30, %c0_31, %c0_32] : memref<8x8x128xf32, #tpu.memory_space<vmem>>, vector<1x8x128xf32>
    %105 = vector.shape_cast %104 : vector<1x8x128xf32> to vector<8x128xf32>
    %106 = vector.shape_cast %103 : vector<8x128xf32> to vector<1x8x128xf32>
    tpu.vector_store %arg5[%c2_30, %c0_31, %c0_32], %106 {strides = array<i32>} : memref<8x8x128xf32, #tpu.memory_space<vmem>>, vector<1x8x128xf32>,
    %c3 = arith.constant 3 : index
    %c0_33 = arith.constant 0 : index
    %c0_34 = arith.constant 0 : index
    %107 = vector.load %arg1[%c3, %c0_33, %c0_34] : memref<8x8x384xf32, #tpu.memory_space<vmem>>, vector<1x8x384xf32>
    %108 = vector.shape_cast %107 : vector<1x8x384xf32> to vector<8x384xf32>
    %cst_35 = arith.constant dense<0.000000e+00> : vector<8x384xf32>
    %109 = tpu.matmul %103, %4, %cst_35 {dimension_numbers = #tpu.dot_dimension_numbers<[1], [0], [0], [1], [0, 0, 1, 1], [], []>} : vector<8x128xf32>, vector<128x384xf32>, vector<8x384xf32> -> vector<8x384xf32>
    %110 = vector.extract_strided_slice %108 {offsets = [0, 0], sizes = [8, 128], strides = [1, 1]} : vector<8x384xf32> to vector<8x128xf32>
    %111 = vector.extract_strided_slice %109 {offsets = [0, 0], sizes = [8, 128], strides = [1, 1]} : vector<8x384xf32> to vector<8x128xf32>
    %112 = arith.addf %110, %111 : vector<8x128xf32>
    %113 = arith.negf %112 : vector<8x128xf32>
    %114 = math.exp %113 : vector<8x128xf32>
    %cst_36 = arith.constant 1.000000e+00 : f32
    %115 = vector.broadcast %cst_36 : f32 to vector<8x128xf32>
    %116 = arith.addf %115, %114 : vector<8x128xf32>
    %117 = arith.divf %115, %116 : vector<8x128xf32>
    %118 = vector.extract_strided_slice %108 {offsets = [0, 128], sizes = [8, 128], strides = [1, 1]} : vector<8x384xf32> to vector<8x128xf32>
    %119 = vector.extract_strided_slice %109 {offsets = [0, 128], sizes = [8, 128], strides = [1, 1]} : vector<8x384xf32> to vector<8x128xf32>
    %120 = arith.addf %118, %119 : vector<8x128xf32>
    %121 = arith.negf %120 : vector<8x128xf32>
    %122 = math.exp %121 : vector<8x128xf32>
    %cst_37 = arith.constant 1.000000e+00 : f32
    %123 = vector.broadcast %cst_37 : f32 to vector<8x128xf32>
    %124 = arith.addf %123, %122 : vector<8x128xf32>
    %125 = arith.divf %123, %124 : vector<8x128xf32>
    %126 = vector.extract_strided_slice %108 {offsets = [0, 256], sizes = [8, 128], strides = [1, 1]} : vector<8x384xf32> to vector<8x128xf32>
    %127 = vector.extract_strided_slice %109 {offsets = [0, 256], sizes = [8, 128], strides = [1, 1]} : vector<8x384xf32> to vector<8x128xf32>
    %128 = arith.addf %127, %7 : vector<8x128xf32>
    %129 = arith.mulf %117, %128 : vector<8x128xf32>
    %130 = arith.addf %126, %129 : vector<8x128xf32>
    %131 = math.tanh %130 : vector<8x128xf32>
    %cst_38 = arith.constant 1.000000e+00 : f32
    %132 = vector.broadcast %cst_38 : f32 to vector<8x128xf32>
    %133 = arith.subf %132, %125 : vector<8x128xf32>
    %134 = arith.mulf %133, %131 : vector<8x128xf32>
    %135 = arith.mulf %125, %103 : vector<8x128xf32>
    %136 = arith.addf %134, %135 : vector<8x128xf32>
    %c3_39 = arith.constant 3 : index
    %c0_40 = arith.constant 0 : index
    %c0_41 = arith.constant 0 : index
    %137 = vector.load %arg5[%c3_39, %c0_40, %c0_41] : memref<8x8x128xf32, #tpu.memory_space<vmem>>, vector<1x8x128xf32>
    %138 = vector.shape_cast %137 : vector<1x8x128xf32> to vector<8x128xf32>
    %139 = vector.shape_cast %136 : vector<8x128xf32> to vector<1x8x128xf32>
    tpu.vector_store %arg5[%c3_39, %c0_40, %c0_41], %139 {strides = array<i32>} : memref<8x8x128xf32, #tpu.memory_space<vmem>>, vector<1x8x128xf32>,
    %c4 = arith.constant 4 : index
    %c0_42 = arith.constant 0 : index
    %c0_43 = arith.constant 0 : index
    %140 = vector.load %arg1[%c4, %c0_42, %c0_43] : memref<8x8x384xf32, #tpu.memory_space<vmem>>, vector<1x8x384xf32>
    %141 = vector.shape_cast %140 : vector<1x8x384xf32> to vector<8x384xf32>
    %cst_44 = arith.constant dense<0.000000e+00> : vector<8x384xf32>
    %142 = tpu.matmul %136, %4, %cst_44 {dimension_numbers = #tpu.dot_dimension_numbers<[1], [0], [0], [1], [0, 0, 1, 1], [], []>} : vector<8x128xf32>, vector<128x384xf32>, vector<8x384xf32> -> vector<8x384xf32>
    %143 = vector.extract_strided_slice %141 {offsets = [0, 0], sizes = [8, 128], strides = [1, 1]} : vector<8x384xf32> to vector<8x128xf32>
    %144 = vector.extract_strided_slice %142 {offsets = [0, 0], sizes = [8, 128], strides = [1, 1]} : vector<8x384xf32> to vector<8x128xf32>
    %145 = arith.addf %143, %144 : vector<8x128xf32>
    %146 = arith.negf %145 : vector<8x128xf32>
    %147 = math.exp %146 : vector<8x128xf32>
    %cst_45 = arith.constant 1.000000e+00 : f32
    %148 = vector.broadcast %cst_45 : f32 to vector<8x128xf32>
    %149 = arith.addf %148, %147 : vector<8x128xf32>
    %150 = arith.divf %148, %149 : vector<8x128xf32>
    %151 = vector.extract_strided_slice %141 {offsets = [0, 128], sizes = [8, 128], strides = [1, 1]} : vector<8x384xf32> to vector<8x128xf32>
    %152 = vector.extract_strided_slice %142 {offsets = [0, 128], sizes = [8, 128], strides = [1, 1]} : vector<8x384xf32> to vector<8x128xf32>
    %153 = arith.addf %151, %152 : vector<8x128xf32>
    %154 = arith.negf %153 : vector<8x128xf32>
    %155 = math.exp %154 : vector<8x128xf32>
    %cst_46 = arith.constant 1.000000e+00 : f32
    %156 = vector.broadcast %cst_46 : f32 to vector<8x128xf32>
    %157 = arith.addf %156, %155 : vector<8x128xf32>
    %158 = arith.divf %156, %157 : vector<8x128xf32>
    %159 = vector.extract_strided_slice %141 {offsets = [0, 256], sizes = [8, 128], strides = [1, 1]} : vector<8x384xf32> to vector<8x128xf32>
    %160 = vector.extract_strided_slice %142 {offsets = [0, 256], sizes = [8, 128], strides = [1, 1]} : vector<8x384xf32> to vector<8x128xf32>
    %161 = arith.addf %160, %7 : vector<8x128xf32>
    %162 = arith.mulf %150, %161 : vector<8x128xf32>
    %163 = arith.addf %159, %162 : vector<8x128xf32>
    %164 = math.tanh %163 : vector<8x128xf32>
    %cst_47 = arith.constant 1.000000e+00 : f32
    %165 = vector.broadcast %cst_47 : f32 to vector<8x128xf32>
    %166 = arith.subf %165, %158 : vector<8x128xf32>
    %167 = arith.mulf %166, %164 : vector<8x128xf32>
    %168 = arith.mulf %158, %136 : vector<8x128xf32>
    %169 = arith.addf %167, %168 : vector<8x128xf32>
    %c4_48 = arith.constant 4 : index
    %c0_49 = arith.constant 0 : index
    %c0_50 = arith.constant 0 : index
    %170 = vector.load %arg5[%c4_48, %c0_49, %c0_50] : memref<8x8x128xf32, #tpu.memory_space<vmem>>, vector<1x8x128xf32>
    %171 = vector.shape_cast %170 : vector<1x8x128xf32> to vector<8x128xf32>
    %172 = vector.shape_cast %169 : vector<8x128xf32> to vector<1x8x128xf32>
    tpu.vector_store %arg5[%c4_48, %c0_49, %c0_50], %172 {strides = array<i32>} : memref<8x8x128xf32, #tpu.memory_space<vmem>>, vector<1x8x128xf32>,
    %c5 = arith.constant 5 : index
    %c0_51 = arith.constant 0 : index
    %c0_52 = arith.constant 0 : index
    %173 = vector.load %arg1[%c5, %c0_51, %c0_52] : memref<8x8x384xf32, #tpu.memory_space<vmem>>, vector<1x8x384xf32>
    %174 = vector.shape_cast %173 : vector<1x8x384xf32> to vector<8x384xf32>
    %cst_53 = arith.constant dense<0.000000e+00> : vector<8x384xf32>
    %175 = tpu.matmul %169, %4, %cst_53 {dimension_numbers = #tpu.dot_dimension_numbers<[1], [0], [0], [1], [0, 0, 1, 1], [], []>} : vector<8x128xf32>, vector<128x384xf32>, vector<8x384xf32> -> vector<8x384xf32>
    %176 = vector.extract_strided_slice %174 {offsets = [0, 0], sizes = [8, 128], strides = [1, 1]} : vector<8x384xf32> to vector<8x128xf32>
    %177 = vector.extract_strided_slice %175 {offsets = [0, 0], sizes = [8, 128], strides = [1, 1]} : vector<8x384xf32> to vector<8x128xf32>
    %178 = arith.addf %176, %177 : vector<8x128xf32>
    %179 = arith.negf %178 : vector<8x128xf32>
    %180 = math.exp %179 : vector<8x128xf32>
    %cst_54 = arith.constant 1.000000e+00 : f32
    %181 = vector.broadcast %cst_54 : f32 to vector<8x128xf32>
    %182 = arith.addf %181, %180 : vector<8x128xf32>
    %183 = arith.divf %181, %182 : vector<8x128xf32>
    %184 = vector.extract_strided_slice %174 {offsets = [0, 128], sizes = [8, 128], strides = [1, 1]} : vector<8x384xf32> to vector<8x128xf32>
    %185 = vector.extract_strided_slice %175 {offsets = [0, 128], sizes = [8, 128], strides = [1, 1]} : vector<8x384xf32> to vector<8x128xf32>
    %186 = arith.addf %184, %185 : vector<8x128xf32>
    %187 = arith.negf %186 : vector<8x128xf32>
    %188 = math.exp %187 : vector<8x128xf32>
    %cst_55 = arith.constant 1.000000e+00 : f32
    %189 = vector.broadcast %cst_55 : f32 to vector<8x128xf32>
    %190 = arith.addf %189, %188 : vector<8x128xf32>
    %191 = arith.divf %189, %190 : vector<8x128xf32>
    %192 = vector.extract_strided_slice %174 {offsets = [0, 256], sizes = [8, 128], strides = [1, 1]} : vector<8x384xf32> to vector<8x128xf32>
    %193 = vector.extract_strided_slice %175 {offsets = [0, 256], sizes = [8, 128], strides = [1, 1]} : vector<8x384xf32> to vector<8x128xf32>
    %194 = arith.addf %193, %7 : vector<8x128xf32>
    %195 = arith.mulf %183, %194 : vector<8x128xf32>
    %196 = arith.addf %192, %195 : vector<8x128xf32>
    %197 = math.tanh %196 : vector<8x128xf32>
    %cst_56 = arith.constant 1.000000e+00 : f32
    %198 = vector.broadcast %cst_56 : f32 to vector<8x128xf32>
    %199 = arith.subf %198, %191 : vector<8x128xf32>
    %200 = arith.mulf %199, %197 : vector<8x128xf32>
    %201 = arith.mulf %191, %169 : vector<8x128xf32>
    %202 = arith.addf %200, %201 : vector<8x128xf32>
    %c5_57 = arith.constant 5 : index
    %c0_58 = arith.constant 0 : index
    %c0_59 = arith.constant 0 : index
    %203 = vector.load %arg5[%c5_57, %c0_58, %c0_59] : memref<8x8x128xf32, #tpu.memory_space<vmem>>, vector<1x8x128xf32>
    %204 = vector.shape_cast %203 : vector<1x8x128xf32> to vector<8x128xf32>
    %205 = vector.shape_cast %202 : vector<8x128xf32> to vector<1x8x128xf32>
    tpu.vector_store %arg5[%c5_57, %c0_58, %c0_59], %205 {strides = array<i32>} : memref<8x8x128xf32, #tpu.memory_space<vmem>>, vector<1x8x128xf32>,
    %c6 = arith.constant 6 : index
    %c0_60 = arith.constant 0 : index
    %c0_61 = arith.constant 0 : index
    %206 = vector.load %arg1[%c6, %c0_60, %c0_61] : memref<8x8x384xf32, #tpu.memory_space<vmem>>, vector<1x8x384xf32>
    %207 = vector.shape_cast %206 : vector<1x8x384xf32> to vector<8x384xf32>
    %cst_62 = arith.constant dense<0.000000e+00> : vector<8x384xf32>
    %208 = tpu.matmul %202, %4, %cst_62 {dimension_numbers = #tpu.dot_dimension_numbers<[1], [0], [0], [1], [0, 0, 1, 1], [], []>} : vector<8x128xf32>, vector<128x384xf32>, vector<8x384xf32> -> vector<8x384xf32>
    %209 = vector.extract_strided_slice %207 {offsets = [0, 0], sizes = [8, 128], strides = [1, 1]} : vector<8x384xf32> to vector<8x128xf32>
    %210 = vector.extract_strided_slice %208 {offsets = [0, 0], sizes = [8, 128], strides = [1, 1]} : vector<8x384xf32> to vector<8x128xf32>
    %211 = arith.addf %209, %210 : vector<8x128xf32>
    %212 = arith.negf %211 : vector<8x128xf32>
    %213 = math.exp %212 : vector<8x128xf32>
    %cst_63 = arith.constant 1.000000e+00 : f32
    %214 = vector.broadcast %cst_63 : f32 to vector<8x128xf32>
    %215 = arith.addf %214, %213 : vector<8x128xf32>
    %216 = arith.divf %214, %215 : vector<8x128xf32>
    %217 = vector.extract_strided_slice %207 {offsets = [0, 128], sizes = [8, 128], strides = [1, 1]} : vector<8x384xf32> to vector<8x128xf32>
    %218 = vector.extract_strided_slice %208 {offsets = [0, 128], sizes = [8, 128], strides = [1, 1]} : vector<8x384xf32> to vector<8x128xf32>
    %219 = arith.addf %217, %218 : vector<8x128xf32>
    %220 = arith.negf %219 : vector<8x128xf32>
    %221 = math.exp %220 : vector<8x128xf32>
    %cst_64 = arith.constant 1.000000e+00 : f32
    %222 = vector.broadcast %cst_64 : f32 to vector<8x128xf32>
    %223 = arith.addf %222, %221 : vector<8x128xf32>
    %224 = arith.divf %222, %223 : vector<8x128xf32>
    %225 = vector.extract_strided_slice %207 {offsets = [0, 256], sizes = [8, 128], strides = [1, 1]} : vector<8x384xf32> to vector<8x128xf32>
    %226 = vector.extract_strided_slice %208 {offsets = [0, 256], sizes = [8, 128], strides = [1, 1]} : vector<8x384xf32> to vector<8x128xf32>
    %227 = arith.addf %226, %7 : vector<8x128xf32>
    %228 = arith.mulf %216, %227 : vector<8x128xf32>
    %229 = arith.addf %225, %228 : vector<8x128xf32>
    %230 = math.tanh %229 : vector<8x128xf32>
    %cst_65 = arith.constant 1.000000e+00 : f32
    %231 = vector.broadcast %cst_65 : f32 to vector<8x128xf32>
    %232 = arith.subf %231, %224 : vector<8x128xf32>
    %233 = arith.mulf %232, %230 : vector<8x128xf32>
    %234 = arith.mulf %224, %202 : vector<8x128xf32>
    %235 = arith.addf %233, %234 : vector<8x128xf32>
    %c6_66 = arith.constant 6 : index
    %c0_67 = arith.constant 0 : index
    %c0_68 = arith.constant 0 : index
    %236 = vector.load %arg5[%c6_66, %c0_67, %c0_68] : memref<8x8x128xf32, #tpu.memory_space<vmem>>, vector<1x8x128xf32>
    %237 = vector.shape_cast %236 : vector<1x8x128xf32> to vector<8x128xf32>
    %238 = vector.shape_cast %235 : vector<8x128xf32> to vector<1x8x128xf32>
    tpu.vector_store %arg5[%c6_66, %c0_67, %c0_68], %238 {strides = array<i32>} : memref<8x8x128xf32, #tpu.memory_space<vmem>>, vector<1x8x128xf32>,
    %c7 = arith.constant 7 : index
    %c0_69 = arith.constant 0 : index
    %c0_70 = arith.constant 0 : index
    %239 = vector.load %arg1[%c7, %c0_69, %c0_70] : memref<8x8x384xf32, #tpu.memory_space<vmem>>, vector<1x8x384xf32>
    %240 = vector.shape_cast %239 : vector<1x8x384xf32> to vector<8x384xf32>
    %cst_71 = arith.constant dense<0.000000e+00> : vector<8x384xf32>
    %241 = tpu.matmul %235, %4, %cst_71 {dimension_numbers = #tpu.dot_dimension_numbers<[1], [0], [0], [1], [0, 0, 1, 1], [], []>} : vector<8x128xf32>, vector<128x384xf32>, vector<8x384xf32> -> vector<8x384xf32>
    %242 = vector.extract_strided_slice %240 {offsets = [0, 0], sizes = [8, 128], strides = [1, 1]} : vector<8x384xf32> to vector<8x128xf32>
    %243 = vector.extract_strided_slice %241 {offsets = [0, 0], sizes = [8, 128], strides = [1, 1]} : vector<8x384xf32> to vector<8x128xf32>
    %244 = arith.addf %242, %243 : vector<8x128xf32>
    %245 = arith.negf %244 : vector<8x128xf32>
    %246 = math.exp %245 : vector<8x128xf32>
    %cst_72 = arith.constant 1.000000e+00 : f32
    %247 = vector.broadcast %cst_72 : f32 to vector<8x128xf32>
    %248 = arith.addf %247, %246 : vector<8x128xf32>
    %249 = arith.divf %247, %248 : vector<8x128xf32>
    %250 = vector.extract_strided_slice %240 {offsets = [0, 128], sizes = [8, 128], strides = [1, 1]} : vector<8x384xf32> to vector<8x128xf32>
    %251 = vector.extract_strided_slice %241 {offsets = [0, 128], sizes = [8, 128], strides = [1, 1]} : vector<8x384xf32> to vector<8x128xf32>
    %252 = arith.addf %250, %251 : vector<8x128xf32>
    %253 = arith.negf %252 : vector<8x128xf32>
    %254 = math.exp %253 : vector<8x128xf32>
    %cst_73 = arith.constant 1.000000e+00 : f32
    %255 = vector.broadcast %cst_73 : f32 to vector<8x128xf32>
    %256 = arith.addf %255, %254 : vector<8x128xf32>
    %257 = arith.divf %255, %256 : vector<8x128xf32>
    %258 = vector.extract_strided_slice %240 {offsets = [0, 256], sizes = [8, 128], strides = [1, 1]} : vector<8x384xf32> to vector<8x128xf32>
    %259 = vector.extract_strided_slice %241 {offsets = [0, 256], sizes = [8, 128], strides = [1, 1]} : vector<8x384xf32> to vector<8x128xf32>
    %260 = arith.addf %259, %7 : vector<8x128xf32>
    %261 = arith.mulf %249, %260 : vector<8x128xf32>
    %262 = arith.addf %258, %261 : vector<8x128xf32>
    %263 = math.tanh %262 : vector<8x128xf32>
    %cst_74 = arith.constant 1.000000e+00 : f32
    %264 = vector.broadcast %cst_74 : f32 to vector<8x128xf32>
    %265 = arith.subf %264, %257 : vector<8x128xf32>
    %266 = arith.mulf %265, %263 : vector<8x128xf32>
    %267 = arith.mulf %257, %235 : vector<8x128xf32>
    %268 = arith.addf %266, %267 : vector<8x128xf32>
    %c7_75 = arith.constant 7 : index
    %c0_76 = arith.constant 0 : index
    %c0_77 = arith.constant 0 : index
    %269 = vector.load %arg5[%c7_75, %c0_76, %c0_77] : memref<8x8x128xf32, #tpu.memory_space<vmem>>, vector<1x8x128xf32>
    %270 = vector.shape_cast %269 : vector<1x8x128xf32> to vector<8x128xf32>
    %271 = vector.shape_cast %268 : vector<8x128xf32> to vector<1x8x128xf32>
    tpu.vector_store %arg5[%c7_75, %c0_76, %c0_77], %271 {strides = array<i32>} : memref<8x8x128xf32, #tpu.memory_space<vmem>>, vector<1x8x128xf32>,
    %c0_78 = arith.constant 0 : index
    %c0_79 = arith.constant 0 : index
    %272 = vector.load %arg6[%c0_78, %c0_79] : memref<8x128xf32, #tpu.memory_space<vmem>>, vector<8x128xf32>
    tpu.vector_store %arg6[%c0_78, %c0_79], %268 {strides = array<i32>} : memref<8x128xf32, #tpu.memory_space<vmem>>, vector<8x128xf32>,
    return
  }
  func.func @transform_0(%arg0: i32) -> (i32, i32, i32) {
    %c0_i32 = arith.constant 0 : i32
    %c0_i32_0 = arith.constant 0 : i32
    %c0_i32_1 = arith.constant 0 : i32
    return %arg0, %c0_i32, %c0_i32_0 : i32, i32, i32
  }
  func.func @transform_1(%arg0: i32) -> (i32, i32) {
    %c0_i32 = arith.constant 0 : i32
    %c0_i32_0 = arith.constant 0 : i32
    %c0_i32_1 = arith.constant 0 : i32
    return %c0_i32, %c0_i32_0 : i32, i32
  }
  func.func @transform_2(%arg0: i32) -> (i32, i32) {
    %c0_i32 = arith.constant 0 : i32
    %c0_i32_0 = arith.constant 0 : i32
    %c0_i32_1 = arith.constant 0 : i32
    return %c0_i32, %c0_i32_0 : i32, i32
  }
  func.func @transform_3(%arg0: i32) -> (i32, i32) {
    %c0_i32 = arith.constant 0 : i32
    %c0_i32_0 = arith.constant 0 : i32
    %c0_i32_1 = arith.constant 0 : i32
    return %c0_i32, %c0_i32_0 : i32, i32
  }
  func.func @transform_4(%arg0: i32) -> (i32, i32, i32) {
    %c0_i32 = arith.constant 0 : i32
    %c0_i32_0 = arith.constant 0 : i32
    %c0_i32_1 = arith.constant 0 : i32
    return %arg0, %c0_i32, %c0_i32_0 : i32, i32, i32
  }
}

</mosaic_0001>

<llo_original>
// kernel: tpu_custom_call.1
$region0: #{tpu_custom_call.1}
  #allocation0 [shape = 'u32[]', space=smem, size = 0x4, offset = 0x4, fixed_abs, tag = 'smem constant byte address 0x4 - core index']
  #allocation1 [shape = 'u32[144,128]{1,0:T(1,128)}', space=vmem, size = 0x12000, scoped, tag = 'internal scratch']
  #allocation2 [shape = 'f32[8,128]{1,0:T(8,128)}', space=vmem, size = 0x1000, scoped, tag = 'scratch operand']
  %s0 = inlined_call_operand.hbm [shape: f32[8,8,384], index: 0, kind: input, shape index: {}]
  %s1 = inlined_call_operand.hbm [shape: f32[128,384], index: 1, kind: input, shape index: {}]
  %s2 = inlined_call_operand.vmem [shape: f32[1,128], index: 2, kind: input, shape index: {}]
  %s3 = inlined_call_operand.vmem [shape: f32[8,128], index: 3, kind: input, shape index: {}]
  %s4 = inlined_call_operand.hbm [shape: f32[8,8,128], index: 4, kind: output, shape index: {}]
  %s5 = sld [smem:[#allocation0]]
  $region38: #{tpu_custom_call.1} parent=0
    _
  %s7 = ssub.s32 1, %s5
  %s8 = scalar_select 0, %s7, %s5
  $region1: #{tpu_custom_call.1} parent=0
    #allocation3 [shape = 'u8[98304]{0}', space=vmem, size = 0x18000, scoped, tag = 'input window, operand 0, single buffered']
    #allocation4 [shape = 's32[1]{0}', space=sflag, size = 0x4, scoped, tag = 'scoped memory for tpu_custom_call.1']
    #allocation5 [shape = 's32[1]{0}', space=sflag, size = 0x4, scoped, tag = 'scoped memory for tpu_custom_call.1']
    #allocation6 [shape = 'u8[196608]{0}', space=vmem, size = 0x30000, scoped, tag = 'input window, operand 1, single buffered']
    #allocation7 [shape = 's32[1]{0}', space=sflag, size = 0x4, scoped, tag = 'scoped memory for tpu_custom_call.1']
    #allocation8 [shape = 'u8[32768]{0}', space=vmem, size = 0x8000, scoped, tag = 'output window, operand 0, single buffered']
    %9 = vsyncpa [#allocation4], 0
    %10 = vsyncpa [#allocation7], 0
    %11 = vsyncpa [#allocation5], 0
    // Predicated region
    $region2: #{tpu_custom_call.1} parent=1 // pred_check
      _
    $region3: #{tpu_custom_call.1} parent=1 // pred_check_branch
      %13 = sbr.rel (0) target = $region5
    $region4: #{tpu_custom_call.1} parent=1 // pred_region
      %s15 = ssub.s32 3072, 3072
      %16 = vsyncadd [#allocation4], %s15
      %s17 = sshll.u32 [#allocation3], 4
      %s18 = int_to_ptr.vmem [resolvable:$true] %s17
      %23 = dma.hbm_to_vmem [thread:$0]  %s0, 3072, %s18, [#allocation4], 384, 384, 24
    $region5: #{tpu_custom_call.1} parent=1 // pred_fallthru
      _
    // Predicated region
    $region6: #{tpu_custom_call.1} parent=1 // pred_check
      _
    $region7: #{tpu_custom_call.1} parent=1 // pred_check_branch
      %25 = sbr.rel (0) target = $region9
    $region8: #{tpu_custom_call.1} parent=1 // pred_region
      %s27 = ssub.s32 6144, 6144
      %28 = vsyncadd [#allocation7], %s27
      %s29 = sshll.u32 [#allocation6], 4
      %s30 = int_to_ptr.vmem [resolvable:$true] %s29
      %35 = dma.hbm_to_vmem [thread:$0]  %s1, 6144, %s30, [#allocation7], 384, 384, 24
    $region9: #{tpu_custom_call.1} parent=1 // pred_fallthru
      _
    // Predicated region
    $region10: #{tpu_custom_call.1} parent=1 // pred_check
      _
    $region11: #{tpu_custom_call.1} parent=1 // pred_check_branch
      %37 = sbr.rel (0) target = $region13
    $region12: #{tpu_custom_call.1} parent=1 // pred_region
      _
    $region13: #{tpu_custom_call.1} parent=1 // pred_fallthru
      _
    // Predicated region
    $region14: #{tpu_custom_call.1} parent=1 // pred_check
      _
    $region15: #{tpu_custom_call.1} parent=1 // pred_check_branch
      %39 = sbr.rel (0) target = $region17
    $region16: #{tpu_custom_call.1} parent=1 // pred_region
      _
    $region17: #{tpu_custom_call.1} parent=1 // pred_fallthru
      _
    // Predicated region
    $region18: #{tpu_custom_call.1} parent=1 // pred_check
      _
    $region19: #{tpu_custom_call.1} parent=1 // pred_check_branch
      %41 = sbr.rel (0) target = $region21
    $region20: #{tpu_custom_call.1} parent=1 // pred_region
      %42 = dma.done [#allocation4], 3072
    $region21: #{tpu_custom_call.1} parent=1 // pred_fallthru
      _
    // Predicated region
    $region22: #{tpu_custom_call.1} parent=1 // pred_check
      _
    $region23: #{tpu_custom_call.1} parent=1 // pred_check_branch
      %44 = sbr.rel (0) target = $region25
    $region24: #{tpu_custom_call.1} parent=1 // pred_region
      %45 = dma.done [#allocation7], 6144
    $region25: #{tpu_custom_call.1} parent=1 // pred_fallthru
      _
    %p46 = scmp.eq.s32.totalorder 0, 0
    // Predicated region
    $region26: #{tpu_custom_call.1} parent=1 // pred_check
      %p47 = pneg %p46
    $region27: #{tpu_custom_call.1} parent=1 // pred_check_branch
      %49 = sbr.rel (%p47) target = $region29
    $region28: #{tpu_custom_call.1} parent=1 // pred_region
      %v50 = vld [vmem:[%s3] sm:$0xff]
      %51 = vst [vmem:[#allocation2] sm:$0xff] %v50
    $region29: #{tpu_custom_call.1} parent=1 // pred_fallthru
      _
    %v52 = vld [vmem:[#allocation2] sm:$0xff]
    %v53 = vld [vmem:[#allocation6] sm:$0xff]
    %v54 = vld [vmem:[#allocation6 + $0x8] sm:$0xff]
    %v55 = vld [vmem:[#allocation6 + $0x10] sm:$0xff]
    %v56 = vld [vmem:[#allocation6 + $0x18] sm:$0xff]
    %v57 = vld [vmem:[#allocation6 + $0x20] sm:$0xff]
    %v58 = vld [vmem:[#allocation6 + $0x28] sm:$0xff]
    %v59 = vld [vmem:[#allocation6 + $0x30] sm:$0xff]
    %v60 = vld [vmem:[#allocation6 + $0x38] sm:$0xff]
    %v61 = vld [vmem:[#allocation6 + $0x40] sm:$0xff]
    %v62 = vld [vmem:[#allocation6 + $0x48] sm:$0xff]
    %v63 = vld [vmem:[#allocation6 + $0x50] sm:$0xff]
    %v64 = vld [vmem:[#allocation6 + $0x58] sm:$0xff]
    %v65 = vld [vmem:[#allocation6 + $0x60] sm:$0xff]
    %v66 = vld [vmem:[#allocation6 + $0x68] sm:$0xff]
    %v67 = vld [vmem:[#allocation6 + $0x70] sm:$0xff]
    %v68 = vld [vmem:[#allocation6 + $0x78] sm:$0xff]
    %v69 = vld [vmem:[#allocation6 + $0x80] sm:$0xff]
    %v70 = vld [vmem:[#allocation6 + $0x88] sm:$0xff]
    %v71 = vld [vmem:[#allocation6 + $0x90] sm:$0xff]
    %v72 = vld [vmem:[#allocation6 + $0x98] sm:$0xff]
    %v73 = vld [vmem:[#allocation6 + $0xa0] sm:$0xff]
    %v74 = vld [vmem:[#allocation6 + $0xa8] sm:$0xff]
    %v75 = vld [vmem:[#allocation6 + $0xb0] sm:$0xff]
    %v76 = vld [vmem:[#allocation6 + $0xb8] sm:$0xff]
    %v77 = vld [vmem:[#allocation6 + $0xc0] sm:$0xff]
    %v78 = vld [vmem:[#allocation6 + $0xc8] sm:$0xff]
    %v79 = vld [vmem:[#allocation6 + $0xd0] sm:$0xff]
    %v80 = vld [vmem:[#allocation6 + $0xd8] sm:$0xff]
    %v81 = vld [vmem:[#allocation6 + $0xe0] sm:$0xff]
    %v82 = vld [vmem:[#allocation6 + $0xe8] sm:$0xff]
    %v83 = vld [vmem:[#allocation6 + $0xf0] sm:$0xff]
    %v84 = vld [vmem:[#allocation6 + $0xf8] sm:$0xff]
    %v85 = vld [vmem:[#allocation6 + $0x100] sm:$0xff]
    %v86 = vld [vmem:[#allocation6 + $0x108] sm:$0xff]
    %v87 = vld [vmem:[#allocation6 + $0x110] sm:$0xff]
    %v88 = vld [vmem:[#allocation6 + $0x118] sm:$0xff]
    %v89 = vld [vmem:[#allocation6 + $0x120] sm:$0xff]
    %v90 = vld [vmem:[#allocation6 + $0x128] sm:$0xff]
    %v91 = vld [vmem:[#allocation6 + $0x130] sm:$0xff]
    %v92 = vld [vmem:[#allocation6 + $0x138] sm:$0xff]
    %v93 = vld [vmem:[#allocation6 + $0x140] sm:$0xff]
    %v94 = vld [vmem:[#allocation6 + $0x148] sm:$0xff]
    %v95 = vld [vmem:[#allocation6 + $0x150] sm:$0xff]
    %v96 = vld [vmem:[#allocation6 + $0x158] sm:$0xff]
    %v97 = vld [vmem:[#allocation6 + $0x160] sm:$0xff]
    %v98 = vld [vmem:[#allocation6 + $0x168] sm:$0xff]
    %v99 = vld [vmem:[#allocation6 + $0x170] sm:$0xff]
    %v100 = vld [vmem:[#allocation6 + $0x178] sm:$0xff]
    %v101 = vld [vmem:[%s2] sm:$0x1]
    %v103 = vlaneseq
    %v104 = vshrl.u32 %v103, 7
    %v105 = vsub.s32 0, %v104
    %v106 = vrot.slane %v101, %v105
    %v108 = vld [vmem:[#allocation3] sm:$0xff]
    %v109 = vld [vmem:[#allocation3 + $0x8] sm:$0xff]
    %v110 = vld [vmem:[#allocation3 + $0x10] sm:$0xff]
    %111 = vmatprep.subr.mxu0 %v54
    %112 = vmatpush1.msra.mxu0 %v53
    %113 = vmatprep.subr.mxu0 %v57
    %114 = vmatpush1.msra.mxu0 %v56
    %115 = vmatprep.subr.mxu0 %v60
    %116 = vmatpush1.msra.mxu0 %v59
    %117 = vmatprep.subr.mxu0 %v63
    %118 = vmatpush1.msra.mxu0 %v62
    %119 = vmatprep.subr.mxu0 %v66
    %120 = vmatpush1.msra.mxu0 %v65
    %121 = vmatprep.subr.mxu0 %v69
    %122 = vmatpush1.msra.mxu0 %v68
    %123 = vmatprep.subr.mxu0 %v72
    %124 = vmatpush1.msra.mxu0 %v71
    %125 = vmatprep.subr.mxu0 %v75
    %126 = vmatpush1.msra.mxu0 %v74
    %127 = vmatprep.subr.mxu0 %v78
    %128 = vmatpush1.msra.mxu0 %v77
    %129 = vmatprep.subr.mxu0 %v81
    %130 = vmatpush1.msra.mxu0 %v80
    %131 = vmatprep.subr.mxu0 %v84
    %132 = vmatpush1.msra.mxu0 %v83
    %133 = vmatprep.subr.mxu0 %v87
    %134 = vmatpush1.msra.mxu0 %v86
    %135 = vmatprep.subr.mxu0 %v90
    %136 = vmatpush1.msra.mxu0 %v89
    %137 = vmatprep.subr.mxu0 %v93
    %138 = vmatpush1.msra.mxu0 %v92
    %139 = vmatprep.subr.mxu0 %v96
    %140 = vmatpush1.msra.mxu0 %v95
    %141 = vmatprep.subr.mxu0 %v99
    %142 = vmatpush1.msra.mxu0 %v98
    %143 = vmatprep.subr.mxu0 0.0
    %144 = vmatpush1.msra.mxu0 0.0
    %145 = vmatprep.subr.mxu0 0.0
    %146 = vmatpush1.msra.mxu0 0.0
    %147 = vmatprep.subr.mxu0 0.0
    %148 = vmatpush1.msra.mxu0 0.0
    %149 = vmatprep.subr.mxu0 0.0
    %150 = vmatpush1.msra.mxu0 0.0
    %151 = vmatprep.subr.mxu0 0.0
    %152 = vmatpush1.msra.mxu0 0.0
    %153 = vmatprep.subr.mxu0 0.0
    %154 = vmatpush1.msra.mxu0 0.0
    %155 = vmatprep.subr.mxu0 0.0
    %156 = vmatpush1.msra.mxu0 0.0
    %157 = vmatprep.subr.mxu0 0.0
    %158 = vmatpush1.msra.mxu0 0.0
    %159 = vmatprep.subr.mxu0 0.0
    %160 = vmatpush1.msra.mxu0 0.0
    %161 = vmatprep.subr.mxu0 0.0
    %162 = vmatpush1.msra.mxu0 0.0
    %163 = vmatprep.subr.mxu0 0.0
    %164 = vmatpush1.msra.mxu0 0.0
    %165 = vmatprep.subr.mxu0 0.0
    %166 = vmatpush1.msra.mxu0 0.0
    %167 = vmatprep.subr.mxu0 0.0
    %168 = vmatpush1.msra.mxu0 0.0
    %169 = vmatprep.subr.mxu0 0.0
    %170 = vmatpush1.msra.mxu0 0.0
    %171 = vmatprep.subr.mxu0 0.0
    %172 = vmatpush1.msra.mxu0 0.0
    %173 = vmatprep.subr.mxu0 0.0
    %174 = vmatpush1.msra.mxu0 0.0
    %175 = vmatprep.mubr.f32.mxu0 0.0
    %176 = vmatmul.mubr.f32.gmra.mrb[0].mxu0 %v52
    %v177 = vpop.f32.mrb[0].mxu0
    %v178 = vadd.f32 0.0, %v177
    %v179 = vpop.f32.mrb[0].mxu0
    %v180 = vadd.f32 0.0, %v179
    %181 = vdwg.mxu0
    %182 = vmatprep.subr.mxu0 0.0
    %183 = vmatpush1.msra.mxu0 %v55
    %184 = vmatprep.subr.mxu0 0.0
    %185 = vmatpush1.msra.mxu0 %v58
    %186 = vmatprep.subr.mxu0 0.0
    %187 = vmatpush1.msra.mxu0 %v61
    %188 = vmatprep.subr.mxu0 0.0
    %189 = vmatpush1.msra.mxu0 %v64
    %190 = vmatprep.subr.mxu0 0.0
    %191 = vmatpush1.msra.mxu0 %v67
    %192 = vmatprep.subr.mxu0 0.0
    %193 = vmatpush1.msra.mxu0 %v70
    %194 = vmatprep.subr.mxu0 0.0
    %195 = vmatpush1.msra.mxu0 %v73
    %196 = vmatprep.subr.mxu0 0.0
    %197 = vmatpush1.msra.mxu0 %v76
    %198 = vmatprep.subr.mxu0 0.0
    %199 = vmatpush1.msra.mxu0 %v79
    %200 = vmatprep.subr.mxu0 0.0
    %201 = vmatpush1.msra.mxu0 %v82
    %202 = vmatprep.subr.mxu0 0.0
    %203 = vmatpush1.msra.mxu0 %v85
    %204 = vmatprep.subr.mxu0 0.0
    %205 = vmatpush1.msra.mxu0 %v88
    %206 = vmatprep.subr.mxu0 0.0
    %207 = vmatpush1.msra.mxu0 %v91
    %208 = vmatprep.subr.mxu0 0.0
    %209 = vmatpush1.msra.mxu0 %v94
    %210 = vmatprep.subr.mxu0 0.0
    %211 = vmatpush1.msra.mxu0 %v97
    %212 = vmatprep.subr.mxu0 0.0
    %213 = vmatpush1.msra.mxu0 %v100
    %214 = vmatprep.subr.mxu0 0.0
    %215 = vmatpush1.msra.mxu0 0.0
    %216 = vmatprep.subr.mxu0 0.0
    %217 = vmatpush1.msra.mxu0 0.0
    %218 = vmatprep.subr.mxu0 0.0
    %219 = vmatpush1.msra.mxu0 0.0
    %220 = vmatprep.subr.mxu0 0.0
    %221 = vmatpush1.msra.mxu0 0.0
    %222 = vmatprep.subr.mxu0 0.0
    %223 = vmatpush1.msra.mxu0 0.0
    %224 = vmatprep.subr.mxu0 0.0
    %225 = vmatpush1.msra.mxu0 0.0
    %226 = vmatprep.subr.mxu0 0.0
    %227 = vmatpush1.msra.mxu0 0.0
    %228 = vmatprep.subr.mxu0 0.0
    %229 = vmatpush1.msra.mxu0 0.0
    %230 = vmatprep.subr.mxu0 0.0
    %231 = vmatpush1.msra.mxu0 0.0
    %232 = vmatprep.subr.mxu0 0.0
    %233 = vmatpush1.msra.mxu0 0.0
    %234 = vmatprep.subr.mxu0 0.0
    %235 = vmatpush1.msra.mxu0 0.0
    %236 = vmatprep.subr.mxu0 0.0
    %237 = vmatpush1.msra.mxu0 0.0
    %238 = vmatprep.subr.mxu0 0.0
    %239 = vmatpush1.msra.mxu0 0.0
    %240 = vmatprep.subr.mxu0 0.0
    %241 = vmatpush1.msra.mxu0 0.0
    %242 = vmatprep.subr.mxu0 0.0
    %243 = vmatpush1.msra.mxu0 0.0
    %244 = vmatprep.subr.mxu0 0.0
    %245 = vmatpush1.msra.mxu0 0.0
    %246 = vmatprep.mubr.f32.mxu0 0.0
    %247 = vmatmul.mubr.f32.gmra.mrb[0].mxu0 %v52
    %v248 = vpop.f32.mrb[0].mxu0
    %v249 = vadd.f32 0.0, %v248
    %v250 = vpop.f32.mrb[0].mxu0
    %251 = vdwg.mxu0
    %v252 = vadd.f32 %v108, %v178
    %v253 = vxor.u32 %v252, 2147483648
    %v254 = vmul.f32 %v253, 1.442695
    %v255 = vpow.pop %v254
    %v256 = vadd.f32 %v255, 1.0
    %v257 = vrcp.pop %v256
    %v258 = vmul.f32 1.0, %v257
    %v259 = vadd.f32 %v109, %v180
    %v260 = vxor.u32 %v259, 2147483648
    %v261 = vmul.f32 %v260, 1.442695
    %v262 = vpow.pop %v261
    %v263 = vadd.f32 %v262, 1.0
    %v264 = vrcp.pop %v263
    %v265 = vmul.f32 1.0, %v264
    %v266 = vadd.f32 %v249, %v106
    %v267 = vmul.f32 %v258, %v266
    %v268 = vadd.f32 %v110, %v267
    %v269 = vtanh.pop %v268
    %v270 = vsub.f32 1.0, %v265
    %v271 = vmul.f32 %v270, %v269
    %v272 = vmul.f32 %v265, %v52
    %v273 = vadd.f32 %v271, %v272
    %274 = vst [vmem:[#allocation8] sm:$0xff] %v273
    %s275 = scalar_lea.vmem [#allocation3], 24
    %v276 = vld [vmem:[%s275] sm:$0xff]
    %v277 = vld [vmem:[%s275 + $0x8] sm:$0xff]
    %v278 = vld [vmem:[%s275 + $0x10] sm:$0xff]
    %279 = vmatprep.subr.mxu0 %v54
    %280 = vmatpush1.msra.mxu0 %v53
    %281 = vmatprep.subr.mxu0 %v57
    %282 = vmatpush1.msra.mxu0 %v56
    %283 = vmatprep.subr.mxu0 %v60
    %284 = vmatpush1.msra.mxu0 %v59
    %285 = vmatprep.subr.mxu0 %v63
    %286 = vmatpush1.msra.mxu0 %v62
    %287 = vmatprep.subr.mxu0 %v66
    %288 = vmatpush1.msra.mxu0 %v65
    %289 = vmatprep.subr.mxu0 %v69
    %290 = vmatpush1.msra.mxu0 %v68
    %291 = vmatprep.subr.mxu0 %v72
    %292 = vmatpush1.msra.mxu0 %v71
    %293 = vmatprep.subr.mxu0 %v75
    %294 = vmatpush1.msra.mxu0 %v74
    %295 = vmatprep.subr.mxu0 %v78
    %296 = vmatpush1.msra.mxu0 %v77
    %297 = vmatprep.subr.mxu0 %v81
    %298 = vmatpush1.msra.mxu0 %v80
    %299 = vmatprep.subr.mxu0 %v84
    %300 = vmatpush1.msra.mxu0 %v83
    %301 = vmatprep.subr.mxu0 %v87
    %302 = vmatpush1.msra.mxu0 %v86
    %303 = vmatprep.subr.mxu0 %v90
    %304 = vmatpush1.msra.mxu0 %v89
    %305 = vmatprep.subr.mxu0 %v93
    %306 = vmatpush1.msra.mxu0 %v92
    %307 = vmatprep.subr.mxu0 %v96
    %308 = vmatpush1.msra.mxu0 %v95
    %309 = vmatprep.subr.mxu0 %v99
    %310 = vmatpush1.msra.mxu0 %v98
    %311 = vmatprep.subr.mxu0 0.0
    %312 = vmatpush1.msra.mxu0 0.0
    %313 = vmatprep.subr.mxu0 0.0
    %314 = vmatpush1.msra.mxu0 0.0
    %315 = vmatprep.subr.mxu0 0.0
    %316 = vmatpush1.msra.mxu0 0.0
    %317 = vmatprep.subr.mxu0 0.0
    %318 = vmatpush1.msra.mxu0 0.0
    %319 = vmatprep.subr.mxu0 0.0
    %320 = vmatpush1.msra.mxu0 0.0
    %321 = vmatprep.subr.mxu0 0.0
    %322 = vmatpush1.msra.mxu0 0.0
    %323 = vmatprep.subr.mxu0 0.0
    %324 = vmatpush1.msra.mxu0 0.0
    %325 = vmatprep.subr.mxu0 0.0
    %326 = vmatpush1.msra.mxu0 0.0
    %327 = vmatprep.subr.mxu0 0.0
    %328 = vmatpush1.msra.mxu0 0.0
    %329 = vmatprep.subr.mxu0 0.0
    %330 = vmatpush1.msra.mxu0 0.0
    %331 = vmatprep.subr.mxu0 0.0
    %332 = vmatpush1.msra.mxu0 0.0
    %333 = vmatprep.subr.mxu0 0.0
    %334 = vmatpush1.msra.mxu0 0.0
    %335 = vmatprep.subr.mxu0 0.0
    %336 = vmatpush1.msra.mxu0 0.0
    %337 = vmatprep.subr.mxu0 0.0
    %338 = vmatpush1.msra.mxu0 0.0
    %339 = vmatprep.subr.mxu0 0.0
    %340 = vmatpush1.msra.mxu0 0.0
    %341 = vmatprep.subr.mxu0 0.0
    %342 = vmatpush1.msra.mxu0 0.0
    %343 = vmatprep.mubr.f32.mxu0 0.0
    %344 = vmatmul.mubr.f32.gmra.mrb[0].mxu0 %v273
    %v345 = vpop.f32.mrb[0].mxu0
    %v346 = vadd.f32 0.0, %v345
    %v347 = vpop.f32.mrb[0].mxu0
    %v348 = vadd.f32 0.0, %v347
    %349 = vdwg.mxu0
    %350 = vmatprep.subr.mxu0 0.0
    %351 = vmatpush1.msra.mxu0 %v55
    %352 = vmatprep.subr.mxu0 0.0
    %353 = vmatpush1.msra.mxu0 %v58
    %354 = vmatprep.subr.mxu0 0.0
    %355 = vmatpush1.msra.mxu0 %v61
    %356 = vmatprep.subr.mxu0 0.0
    %357 = vmatpush1.msra.mxu0 %v64
    %358 = vmatprep.subr.mxu0 0.0
    %359 = vmatpush1.msra.mxu0 %v67
    %360 = vmatprep.subr.mxu0 0.0
    %361 = vmatpush1.msra.mxu0 %v70
    %362 = vmatprep.subr.mxu0 0.0
    %363 = vmatpush1.msra.mxu0 %v73
    %364 = vmatprep.subr.mxu0 0.0
    %365 = vmatpush1.msra.mxu0 %v76
    %366 = vmatprep.subr.mxu0 0.0
    %367 = vmatpush1.msra.mxu0 %v79
    %368 = vmatprep.subr.mxu0 0.0
    %369 = vmatpush1.msra.mxu0 %v82
    %370 = vmatprep.subr.mxu0 0.0
    %371 = vmatpush1.msra.mxu0 %v85
    %372 = vmatprep.subr.mxu0 0.0
    %373 = vmatpush1.msra.mxu0 %v88
    %374 = vmatprep.subr.mxu0 0.0
    %375 = vmatpush1.msra.mxu0 %v91
    %376 = vmatprep.subr.mxu0 0.0
    %377 = vmatpush1.msra.mxu0 %v94
    %378 = vmatprep.subr.mxu0 0.0
    %379 = vmatpush1.msra.mxu0 %v97
    %380 = vmatprep.subr.mxu0 0.0
    %381 = vmatpush1.msra.mxu0 %v100
    %382 = vmatprep.subr.mxu0 0.0
    %383 = vmatpush1.msra.mxu0 0.0
    %384 = vmatprep.subr.mxu0 0.0
    %385 = vmatpush1.msra.mxu0 0.0
    %386 = vmatprep.subr.mxu0 0.0
    %387 = vmatpush1.msra.mxu0 0.0
    %388 = vmatprep.subr.mxu0 0.0
    %389 = vmatpush1.msra.mxu0 0.0
    %390 = vmatprep.subr.mxu0 0.0
    %391 = vmatpush1.msra.mxu0 0.0
    %392 = vmatprep.subr.mxu0 0.0
    %393 = vmatpush1.msra.mxu0 0.0
    %394 = vmatprep.subr.mxu0 0.0
    %395 = vmatpush1.msra.mxu0 0.0
    %396 = vmatprep.subr.mxu0 0.0
    %397 = vmatpush1.msra.mxu0 0.0
    %398 = vmatprep.subr.mxu0 0.0
    %399 = vmatpush1.msra.mxu0 0.0
    %400 = vmatprep.subr.mxu0 0.0
    %401 = vmatpush1.msra.mxu0 0.0
    %402 = vmatprep.subr.mxu0 0.0
    %403 = vmatpush1.msra.mxu0 0.0
    %404 = vmatprep.subr.mxu0 0.0
    %405 = vmatpush1.msra.mxu0 0.0
    %406 = vmatprep.subr.mxu0 0.0
    %407 = vmatpush1.msra.mxu0 0.0
    %408 = vmatprep.subr.mxu0 0.0
    %409 = vmatpush1.msra.mxu0 0.0
    %410 = vmatprep.subr.mxu0 0.0
    %411 = vmatpush1.msra.mxu0 0.0
    %412 = vmatprep.subr.mxu0 0.0
    %413 = vmatpush1.msra.mxu0 0.0
    %414 = vmatprep.mubr.f32.mxu0 0.0
    %415 = vmatmul.mubr.f32.gmra.mrb[0].mxu0 %v273
    %v416 = vpop.f32.mrb[0].mxu0
    %v417 = vadd.f32 0.0, %v416
    %v418 = vpop.f32.mrb[0].mxu0
    %419 = vdwg.mxu0
    %v420 = vadd.f32 %v276, %v346
    %v421 = vxor.u32 %v420, 2147483648
    %v422 = vmul.f32 %v421, 1.442695
    %v423 = vpow.pop %v422
    %v424 = vadd.f32 %v423, 1.0
    %v425 = vrcp.pop %v424
    %v426 = vmul.f32 1.0, %v425
    %v427 = vadd.f32 %v277, %v348
    %v428 = vxor.u32 %v427, 2147483648
    %v429 = vmul.f32 %v428, 1.442695
    %v430 = vpow.pop %v429
    %v431 = vadd.f32 %v430, 1.0
    %v432 = vrcp.pop %v431
    %v433 = vmul.f32 1.0, %v432
    %v434 = vadd.f32 %v417, %v106
    %v435 = vmul.f32 %v426, %v434
    %v436 = vadd.f32 %v278, %v435
    %v437 = vtanh.pop %v436
    %v438 = vsub.f32 1.0, %v433
    %v439 = vmul.f32 %v438, %v437
    %v440 = vmul.f32 %v433, %v273
    %v441 = vadd.f32 %v439, %v440
    %s442 = scalar_lea.vmem [#allocation8], 8
    %443 = vst [vmem:[%s442] sm:$0xff] %v441
    %s444 = scalar_lea.vmem [#allocation3], 48
    %v445 = vld [vmem:[%s444] sm:$0xff]
    %v446 = vld [vmem:[%s444 + $0x8] sm:$0xff]
    %v447 = vld [vmem:[%s444 + $0x10] sm:$0xff]
    %448 = vmatprep.subr.mxu0 %v54
    %449 = vmatpush1.msra.mxu0 %v53
    %450 = vmatprep.subr.mxu0 %v57
    %451 = vmatpush1.msra.mxu0 %v56
    %452 = vmatprep.subr.mxu0 %v60
    %453 = vmatpush1.msra.mxu0 %v59
    %454 = vmatprep.subr.mxu0 %v63
    %455 = vmatpush1.msra.mxu0 %v62
    %456 = vmatprep.subr.mxu0 %v66
    %457 = vmatpush1.msra.mxu0 %v65
    %458 = vmatprep.subr.mxu0 %v69
    %459 = vmatpush1.msra.mxu0 %v68
    %460 = vmatprep.subr.mxu0 %v72
    %461 = vmatpush1.msra.mxu0 %v71
    %462 = vmatprep.subr.mxu0 %v75
    %463 = vmatpush1.msra.mxu0 %v74
    %464 = vmatprep.subr.mxu0 %v78
    %465 = vmatpush1.msra.mxu0 %v77
    %466 = vmatprep.subr.mxu0 %v81
    %467 = vmatpush1.msra.mxu0 %v80
    %468 = vmatprep.subr.mxu0 %v84
    %469 = vmatpush1.msra.mxu0 %v83
    %470 = vmatprep.subr.mxu0 %v87
    %471 = vmatpush1.msra.mxu0 %v86
    %472 = vmatprep.subr.mxu0 %v90
    %473 = vmatpush1.msra.mxu0 %v89
    %474 = vmatprep.subr.mxu0 %v93
    %475 = vmatpush1.msra.mxu0 %v92
    %476 = vmatprep.subr.mxu0 %v96
    %477 = vmatpush1.msra.mxu0 %v95
    %478 = vmatprep.subr.mxu0 %v99
    %479 = vmatpush1.msra.mxu0 %v98
    %480 = vmatprep.subr.mxu0 0.0
    %481 = vmatpush1.msra.mxu0 0.0
    %482 = vmatprep.subr.mxu0 0.0
    %483 = vmatpush1.msra.mxu0 0.0
    %484 = vmatprep.subr.mxu0 0.0
    %485 = vmatpush1.msra.mxu0 0.0
    %486 = vmatprep.subr.mxu0 0.0
    %487 = vmatpush1.msra.mxu0 0.0
    %488 = vmatprep.subr.mxu0 0.0
    %489 = vmatpush1.msra.mxu0 0.0
    %490 = vmatprep.subr.mxu0 0.0
    %491 = vmatpush1.msra.mxu0 0.0
    %492 = vmatprep.subr.mxu0 0.0
    %493 = vmatpush1.msra.mxu0 0.0
    %494 = vmatprep.subr.mxu0 0.0
    %495 = vmatpush1.msra.mxu0 0.0
    %496 = vmatprep.subr.mxu0 0.0
    %497 = vmatpush1.msra.mxu0 0.0
    %498 = vmatprep.subr.mxu0 0.0
    %499 = vmatpush1.msra.mxu0 0.0
    %500 = vmatprep.subr.mxu0 0.0
    %501 = vmatpush1.msra.mxu0 0.0
    %502 = vmatprep.subr.mxu0 0.0
    %503 = vmatpush1.msra.mxu0 0.0
    %504 = vmatprep.subr.mxu0 0.0
    %505 = vmatpush1.msra.mxu0 0.0
    %506 = vmatprep.subr.mxu0 0.0
    %507 = vmatpush1.msra.mxu0 0.0
    %508 = vmatprep.subr.mxu0 0.0
    %509 = vmatpush1.msra.mxu0 0.0
    %510 = vmatprep.subr.mxu0 0.0
    %511 = vmatpush1.msra.mxu0 0.0
    %512 = vmatprep.mubr.f32.mxu0 0.0
    %513 = vmatmul.mubr.f32.gmra.mrb[0].mxu0 %v441
    %v514 = vpop.f32.mrb[0].mxu0
    %v515 = vadd.f32 0.0, %v514
    %v516 = vpop.f32.mrb[0].mxu0
    %v517 = vadd.f32 0.0, %v516
    %518 = vdwg.mxu0
    %519 = vmatprep.subr.mxu0 0.0
    %520 = vmatpush1.msra.mxu0 %v55
    %521 = vmatprep.subr.mxu0 0.0
    %522 = vmatpush1.msra.mxu0 %v58
    %523 = vmatprep.subr.mxu0 0.0
    %524 = vmatpush1.msra.mxu0 %v61
    %525 = vmatprep.subr.mxu0 0.0
    %526 = vmatpush1.msra.mxu0 %v64
    %527 = vmatprep.subr.mxu0 0.0
    %528 = vmatpush1.msra.mxu0 %v67
    %529 = vmatprep.subr.mxu0 0.0
    %530 = vmatpush1.msra.mxu0 %v70
    %531 = vmatprep.subr.mxu0 0.0
    %532 = vmatpush1.msra.mxu0 %v73
    %533 = vmatprep.subr.mxu0 0.0
    %534 = vmatpush1.msra.mxu0 %v76
    %535 = vmatprep.subr.mxu0 0.0
    %536 = vmatpush1.msra.mxu0 %v79
    %537 = vmatprep.subr.mxu0 0.0
    %538 = vmatpush1.msra.mxu0 %v82
    %539 = vmatprep.subr.mxu0 0.0
    %540 = vmatpush1.msra.mxu0 %v85
    %541 = vmatprep.subr.mxu0 0.0
    %542 = vmatpush1.msra.mxu0 %v88
    %543 = vmatprep.subr.mxu0 0.0
    %544 = vmatpush1.msra.mxu0 %v91
    %545 = vmatprep.subr.mxu0 0.0
    %546 = vmatpush1.msra.mxu0 %v94
    %547 = vmatprep.subr.mxu0 0.0
    %548 = vmatpush1.msra.mxu0 %v97
    %549 = vmatprep.subr.mxu0 0.0
    %550 = vmatpush1.msra.mxu0 %v100
    %551 = vmatprep.subr.mxu0 0.0
    %552 = vmatpush1.msra.mxu0 0.0
    %553 = vmatprep.subr.mxu0 0.0
    %554 = vmatpush1.msra.mxu0 0.0
    %555 = vmatprep.subr.mxu0 0.0
    %556 = vmatpush1.msra.mxu0 0.0
    %557 = vmatprep.subr.mxu0 0.0
    %558 = vmatpush1.msra.mxu0 0.0
    %559 = vmatprep.subr.mxu0 0.0
    %560 = vmatpush1.msra.mxu0 0.0
    %561 = vmatprep.subr.mxu0 0.0
    %562 = vmatpush1.msra.mxu0 0.0
    %563 = vmatprep.subr.mxu0 0.0
    %564 = vmatpush1.msra.mxu0 0.0
    %565 = vmatprep.subr.mxu0 0.0
    %566 = vmatpush1.msra.mxu0 0.0
    %567 = vmatprep.subr.mxu0 0.0
    %568 = vmatpush1.msra.mxu0 0.0
    %569 = vmatprep.subr.mxu0 0.0
    %570 = vmatpush1.msra.mxu0 0.0
    %571 = vmatprep.subr.mxu0 0.0
    %572 = vmatpush1.msra.mxu0 0.0
    %573 = vmatprep.subr.mxu0 0.0
    %574 = vmatpush1.msra.mxu0 0.0
    %575 = vmatprep.subr.mxu0 0.0
    %576 = vmatpush1.msra.mxu0 0.0
    %577 = vmatprep.subr.mxu0 0.0
    %578 = vmatpush1.msra.mxu0 0.0
    %579 = vmatprep.subr.mxu0 0.0
    %580 = vmatpush1.msra.mxu0 0.0
    %581 = vmatprep.subr.mxu0 0.0
    %582 = vmatpush1.msra.mxu0 0.0
    %583 = vmatprep.mubr.f32.mxu0 0.0
    %584 = vmatmul.mubr.f32.gmra.mrb[0].mxu0 %v441
    %v585 = vpop.f32.mrb[0].mxu0
    %v586 = vadd.f32 0.0, %v585
    %v587 = vpop.f32.mrb[0].mxu0
    %588 = vdwg.mxu0
    %v589 = vadd.f32 %v445, %v515
    %v590 = vxor.u32 %v589, 2147483648
    %v591 = vmul.f32 %v590, 1.442695
    %v592 = vpow.pop %v591
    %v593 = vadd.f32 %v592, 1.0
    %v594 = vrcp.pop %v593
    %v595 = vmul.f32 1.0, %v594
    %v596 = vadd.f32 %v446, %v517
    %v597 = vxor.u32 %v596, 2147483648
    %v598 = vmul.f32 %v597, 1.442695
    %v599 = vpow.pop %v598
    %v600 = vadd.f32 %v599, 1.0
    %v601 = vrcp.pop %v600
    %v602 = vmul.f32 1.0, %v601
    %v603 = vadd.f32 %v586, %v106
    %v604 = vmul.f32 %v595, %v603
    %v605 = vadd.f32 %v447, %v604
    %v606 = vtanh.pop %v605
    %v607 = vsub.f32 1.0, %v602
    %v608 = vmul.f32 %v607, %v606
    %v609 = vmul.f32 %v602, %v441
    %v610 = vadd.f32 %v608, %v609
    %s611 = scalar_lea.vmem [#allocation8], 16
    %612 = vst [vmem:[%s611] sm:$0xff] %v610
    %s613 = scalar_lea.vmem [#allocation3], 72
    %v614 = vld [vmem:[%s613] sm:$0xff]
    %v615 = vld [vmem:[%s613 + $0x8] sm:$0xff]
    %v616 = vld [vmem:[%s613 + $0x10] sm:$0xff]
    %617 = vmatprep.subr.mxu0 %v54
    %618 = vmatpush1.msra.mxu0 %v53
    %619 = vmatprep.subr.mxu0 %v57
    %620 = vmatpush1.msra.mxu0 %v56
    %621 = vmatprep.subr.mxu0 %v60
    %622 = vmatpush1.msra.mxu0 %v59
    %623 = vmatprep.subr.mxu0 %v63
    %624 = vmatpush1.msra.mxu0 %v62
    %625 = vmatprep.subr.mxu0 %v66
    %626 = vmatpush1.msra.mxu0 %v65
    %627 = vmatprep.subr.mxu0 %v69
    %628 = vmatpush1.msra.mxu0 %v68
    %629 = vmatprep.subr.mxu0 %v72
    %630 = vmatpush1.msra.mxu0 %v71
    %631 = vmatprep.subr.mxu0 %v75
    %632 = vmatpush1.msra.mxu0 %v74
    %633 = vmatprep.subr.mxu0 %v78
    %634 = vmatpush1.msra.mxu0 %v77
    %635 = vmatprep.subr.mxu0 %v81
    %636 = vmatpush1.msra.mxu0 %v80
    %637 = vmatprep.subr.mxu0 %v84
    %638 = vmatpush1.msra.mxu0 %v83
    %639 = vmatprep.subr.mxu0 %v87
    %640 = vmatpush1.msra.mxu0 %v86
    %641 = vmatprep.subr.mxu0 %v90
    %642 = vmatpush1.msra.mxu0 %v89
    %643 = vmatprep.subr.mxu0 %v93
    %644 = vmatpush1.msra.mxu0 %v92
    %645 = vmatprep.subr.mxu0 %v96
    %646 = vmatpush1.msra.mxu0 %v95
    %647 = vmatprep.subr.mxu0 %v99
    %648 = vmatpush1.msra.mxu0 %v98
    %649 = vmatprep.subr.mxu0 0.0
    %650 = vmatpush1.msra.mxu0 0.0
    %651 = vmatprep.subr.mxu0 0.0
    %652 = vmatpush1.msra.mxu0 0.0
    %653 = vmatprep.subr.mxu0 0.0
    %654 = vmatpush1.msra.mxu0 0.0
    %655 = vmatprep.subr.mxu0 0.0
    %656 = vmatpush1.msra.mxu0 0.0
    %657 = vmatprep.subr.mxu0 0.0
    %658 = vmatpush1.msra.mxu0 0.0
    %659 = vmatprep.subr.mxu0 0.0
    %660 = vmatpush1.msra.mxu0 0.0
    %661 = vmatprep.subr.mxu0 0.0
    %662 = vmatpush1.msra.mxu0 0.0
    %663 = vmatprep.subr.mxu0 0.0
    %664 = vmatpush1.msra.mxu0 0.0
    %665 = vmatprep.subr.mxu0 0.0
    %666 = vmatpush1.msra.mxu0 0.0
    %667 = vmatprep.subr.mxu0 0.0
    %668 = vmatpush1.msra.mxu0 0.0
    %669 = vmatprep.subr.mxu0 0.0
    %670 = vmatpush1.msra.mxu0 0.0
    %671 = vmatprep.subr.mxu0 0.0
    %672 = vmatpush1.msra.mxu0 0.0
    %673 = vmatprep.subr.mxu0 0.0
    %674 = vmatpush1.msra.mxu0 0.0
    %675 = vmatprep.subr.mxu0 0.0
    %676 = vmatpush1.msra.mxu0 0.0
    %677 = vmatprep.subr.mxu0 0.0
    %678 = vmatpush1.msra.mxu0 0.0
    %679 = vmatprep.subr.mxu0 0.0
    %680 = vmatpush1.msra.mxu0 0.0
    %681 = vmatprep.mubr.f32.mxu0 0.0
    %682 = vmatmul.mubr.f32.gmra.mrb[0].mxu0 %v610
    %v683 = vpop.f32.mrb[0].mxu0
    %v684 = vadd.f32 0.0, %v683
    %v685 = vpop.f32.mrb[0].mxu0
    %v686 = vadd.f32 0.0, %v685
    %687 = vdwg.mxu0
    %688 = vmatprep.subr.mxu0 0.0
    %689 = vmatpush1.msra.mxu0 %v55
    %690 = vmatprep.subr.mxu0 0.0
    %691 = vmatpush1.msra.mxu0 %v58
    %692 = vmatprep.subr.mxu0 0.0
    %693 = vmatpush1.msra.mxu0 %v61
    %694 = vmatprep.subr.mxu0 0.0
    %695 = vmatpush1.msra.mxu0 %v64
    %696 = vmatprep.subr.mxu0 0.0
    %697 = vmatpush1.msra.mxu0 %v67
    %698 = vmatprep.subr.mxu0 0.0
    %699 = vmatpush1.msra.mxu0 %v70
    %700 = vmatprep.subr.mxu0 0.0
    %701 = vmatpush1.msra.mxu0 %v73
    %702 = vmatprep.subr.mxu0 0.0
    %703 = vmatpush1.msra.mxu0 %v76
    %704 = vmatprep.subr.mxu0 0.0
    %705 = vmatpush1.msra.mxu0 %v79
    %706 = vmatprep.subr.mxu0 0.0
    %707 = vmatpush1.msra.mxu0 %v82
    %708 = vmatprep.subr.mxu0 0.0
    %709 = vmatpush1.msra.mxu0 %v85
    %710 = vmatprep.subr.mxu0 0.0
    %711 = vmatpush1.msra.mxu0 %v88
    %712 = vmatprep.subr.mxu0 0.0
    %713 = vmatpush1.msra.mxu0 %v91
    %714 = vmatprep.subr.mxu0 0.0
    %715 = vmatpush1.msra.mxu0 %v94
    %716 = vmatprep.subr.mxu0 0.0
    %717 = vmatpush1.msra.mxu0 %v97
    %718 = vmatprep.subr.mxu0 0.0
    %719 = vmatpush1.msra.mxu0 %v100
    %720 = vmatprep.subr.mxu0 0.0
    %721 = vmatpush1.msra.mxu0 0.0
    %722 = vmatprep.subr.mxu0 0.0
    %723 = vmatpush1.msra.mxu0 0.0
    %724 = vmatprep.subr.mxu0 0.0
    %725 = vmatpush1.msra.mxu0 0.0
    %726 = vmatprep.subr.mxu0 0.0
    %727 = vmatpush1.msra.mxu0 0.0
    %728 = vmatprep.subr.mxu0 0.0
    %729 = vmatpush1.msra.mxu0 0.0
    %730 = vmatprep.subr.mxu0 0.0
    %731 = vmatpush1.msra.mxu0 0.0
    %732 = vmatprep.subr.mxu0 0.0
    %733 = vmatpush1.msra.mxu0 0.0
    %734 = vmatprep.subr.mxu0 0.0
    %735 = vmatpush1.msra.mxu0 0.0
    %736 = vmatprep.subr.mxu0 0.0
    %737 = vmatpush1.msra.mxu0 0.0
    %738 = vmatprep.subr.mxu0 0.0
    %739 = vmatpush1.msra.mxu0 0.0
    %740 = vmatprep.subr.mxu0 0.0
    %741 = vmatpush1.msra.mxu0 0.0
    %742 = vmatprep.subr.mxu0 0.0
    %743 = vmatpush1.msra.mxu0 0.0
    %744 = vmatprep.subr.mxu0 0.0
    %745 = vmatpush1.msra.mxu0 0.0
    %746 = vmatprep.subr.mxu0 0.0
    %747 = vmatpush1.msra.mxu0 0.0
    %748 = vmatprep.subr.mxu0 0.0
    %749 = vmatpush1.msra.mxu0 0.0
    %750 = vmatprep.subr.mxu0 0.0
    %751 = vmatpush1.msra.mxu0 0.0
    %752 = vmatprep.mubr.f32.mxu0 0.0
    %753 = vmatmul.mubr.f32.gmra.mrb[0].mxu0 %v610
    %v754 = vpop.f32.mrb[0].mxu0
    %v755 = vadd.f32 0.0, %v754
    %v756 = vpop.f32.mrb[0].mxu0
    %757 = vdwg.mxu0
    %v758 = vadd.f32 %v614, %v684
    %v759 = vxor.u32 %v758, 2147483648
    %v760 = vmul.f32 %v759, 1.442695
    %v761 = vpow.pop %v760
    %v762 = vadd.f32 %v761, 1.0
    %v763 = vrcp.pop %v762
    %v764 = vmul.f32 1.0, %v763
    %v765 = vadd.f32 %v615, %v686
    %v766 = vxor.u32 %v765, 2147483648
    %v767 = vmul.f32 %v766, 1.442695
    %v768 = vpow.pop %v767
    %v769 = vadd.f32 %v768, 1.0
    %v770 = vrcp.pop %v769
    %v771 = vmul.f32 1.0, %v770
    %v772 = vadd.f32 %v755, %v106
    %v773 = vmul.f32 %v764, %v772
    %v774 = vadd.f32 %v616, %v773
    %v775 = vtanh.pop %v774
    %v776 = vsub.f32 1.0, %v771
    %v777 = vmul.f32 %v776, %v775
    %v778 = vmul.f32 %v771, %v610
    %v779 = vadd.f32 %v777, %v778
    %s780 = scalar_lea.vmem [#allocation8], 24
    %781 = vst [vmem:[%s780] sm:$0xff] %v779
    %s782 = scalar_lea.vmem [#allocation3], 96
    %v783 = vld [vmem:[%s782] sm:$0xff]
    %v784 = vld [vmem:[%s782 + $0x8] sm:$0xff]
    %v785 = vld [vmem:[%s782 + $0x10] sm:$0xff]
    %786 = vmatprep.subr.mxu0 %v54
    %787 = vmatpush1.msra.mxu0 %v53
    %788 = vmatprep.subr.mxu0 %v57
    %789 = vmatpush1.msra.mxu0 %v56
    %790 = vmatprep.subr.mxu0 %v60
    %791 = vmatpush1.msra.mxu0 %v59
    %792 = vmatprep.subr.mxu0 %v63
    %793 = vmatpush1.msra.mxu0 %v62
    %794 = vmatprep.subr.mxu0 %v66
    %795 = vmatpush1.msra.mxu0 %v65
    %796 = vmatprep.subr.mxu0 %v69
    %797 = vmatpush1.msra.mxu0 %v68
    %798 = vmatprep.subr.mxu0 %v72
    %799 = vmatpush1.msra.mxu0 %v71
    %800 = vmatprep.subr.mxu0 %v75
    %801 = vmatpush1.msra.mxu0 %v74
    %802 = vmatprep.subr.mxu0 %v78
    %803 = vmatpush1.msra.mxu0 %v77
    %804 = vmatprep.subr.mxu0 %v81
    %805 = vmatpush1.msra.mxu0 %v80
    %806 = vmatprep.subr.mxu0 %v84
    %807 = vmatpush1.msra.mxu0 %v83
    %808 = vmatprep.subr.mxu0 %v87
    %809 = vmatpush1.msra.mxu0 %v86
    %810 = vmatprep.subr.mxu0 %v90
    %811 = vmatpush1.msra.mxu0 %v89
    %812 = vmatprep.subr.mxu0 %v93
    %813 = vmatpush1.msra.mxu0 %v92
    %814 = vmatprep.subr.mxu0 %v96
    %815 = vmatpush1.msra.mxu0 %v95
    %816 = vmatprep.subr.mxu0 %v99
    %817 = vmatpush1.msra.mxu0 %v98
    %818 = vmatprep.subr.mxu0 0.0
    %819 = vmatpush1.msra.mxu0 0.0
    %820 = vmatprep.subr.mxu0 0.0
    %821 = vmatpush1.msra.mxu0 0.0
    %822 = vmatprep.subr.mxu0 0.0
    %823 = vmatpush1.msra.mxu0 0.0
    %824 = vmatprep.subr.mxu0 0.0
    %825 = vmatpush1.msra.mxu0 0.0
    %826 = vmatprep.subr.mxu0 0.0
    %827 = vmatpush1.msra.mxu0 0.0
    %828 = vmatprep.subr.mxu0 0.0
    %829 = vmatpush1.msra.mxu0 0.0
    %830 = vmatprep.subr.mxu0 0.0
    %831 = vmatpush1.msra.mxu0 0.0
    %832 = vmatprep.subr.mxu0 0.0
    %833 = vmatpush1.msra.mxu0 0.0
    %834 = vmatprep.subr.mxu0 0.0
    %835 = vmatpush1.msra.mxu0 0.0
    %836 = vmatprep.subr.mxu0 0.0
    %837 = vmatpush1.msra.mxu0 0.0
    %838 = vmatprep.subr.mxu0 0.0
    %839 = vmatpush1.msra.mxu0 0.0
    %840 = vmatprep.subr.mxu0 0.0
    %841 = vmatpush1.msra.mxu0 0.0
    %842 = vmatprep.subr.mxu0 0.0
    %843 = vmatpush1.msra.mxu0 0.0
    %844 = vmatprep.subr.mxu0 0.0
    %845 = vmatpush1.msra.mxu0 0.0
    %846 = vmatprep.subr.mxu0 0.0
    %847 = vmatpush1.msra.mxu0 0.0
    %848 = vmatprep.subr.mxu0 0.0
    %849 = vmatpush1.msra.mxu0 0.0
    %850 = vmatprep.mubr.f32.mxu0 0.0
    %851 = vmatmul.mubr.f32.gmra.mrb[0].mxu0 %v779
    %v852 = vpop.f32.mrb[0].mxu0
    %v853 = vadd.f32 0.0, %v852
    %v854 = vpop.f32.mrb[0].mxu0
    %v855 = vadd.f32 0.0, %v854
    %856 = vdwg.mxu0
    %857 = vmatprep.subr.mxu0 0.0
    %858 = vmatpush1.msra.mxu0 %v55
    %859 = vmatprep.subr.mxu0 0.0
    %860 = vmatpush1.msra.mxu0 %v58
    %861 = vmatprep.subr.mxu0 0.0
    %862 = vmatpush1.msra.mxu0 %v61
    %863 = vmatprep.subr.mxu0 0.0
    %864 = vmatpush1.msra.mxu0 %v64
    %865 = vmatprep.subr.mxu0 0.0
    %866 = vmatpush1.msra.mxu0 %v67
    %867 = vmatprep.subr.mxu0 0.0
    %868 = vmatpush1.msra.mxu0 %v70
    %869 = vmatprep.subr.mxu0 0.0
    %870 = vmatpush1.msra.mxu0 %v73
    %871 = vmatprep.subr.mxu0 0.0
    %872 = vmatpush1.msra.mxu0 %v76
    %873 = vmatprep.subr.mxu0 0.0
    %874 = vmatpush1.msra.mxu0 %v79
    %875 = vmatprep.subr.mxu0 0.0
    %876 = vmatpush1.msra.mxu0 %v82
    %877 = vmatprep.subr.mxu0 0.0
    %878 = vmatpush1.msra.mxu0 %v85
    %879 = vmatprep.subr.mxu0 0.0
    %880 = vmatpush1.msra.mxu0 %v88
    %881 = vmatprep.subr.mxu0 0.0
    %882 = vmatpush1.msra.mxu0 %v91
    %883 = vmatprep.subr.mxu0 0.0
    %884 = vmatpush1.msra.mxu0 %v94
    %885 = vmatprep.subr.mxu0 0.0
    %886 = vmatpush1.msra.mxu0 %v97
    %887 = vmatprep.subr.mxu0 0.0
    %888 = vmatpush1.msra.mxu0 %v100
    %889 = vmatprep.subr.mxu0 0.0
    %890 = vmatpush1.msra.mxu0 0.0
    %891 = vmatprep.subr.mxu0 0.0
    %892 = vmatpush1.msra.mxu0 0.0
    %893 = vmatprep.subr.mxu0 0.0
    %894 = vmatpush1.msra.mxu0 0.0
    %895 = vmatprep.subr.mxu0 0.0
    %896 = vmatpush1.msra.mxu0 0.0
    %897 = vmatprep.subr.mxu0 0.0
    %898 = vmatpush1.msra.mxu0 0.0
    %899 = vmatprep.subr.mxu0 0.0
    %900 = vmatpush1.msra.mxu0 0.0
    %901 = vmatprep.subr.mxu0 0.0
    %902 = vmatpush1.msra.mxu0 0.0
    %903 = vmatprep.subr.mxu0 0.0
    %904 = vmatpush1.msra.mxu0 0.0
    %905 = vmatprep.subr.mxu0 0.0
    %906 = vmatpush1.msra.mxu0 0.0
    %907 = vmatprep.subr.mxu0 0.0
    %908 = vmatpush1.msra.mxu0 0.0
    %909 = vmatprep.subr.mxu0 0.0
    %910 = vmatpush1.msra.mxu0 0.0
    %911 = vmatprep.subr.mxu0 0.0
    %912 = vmatpush1.msra.mxu0 0.0
    %913 = vmatprep.subr.mxu0 0.0
    %914 = vmatpush1.msra.mxu0 0.0
    %915 = vmatprep.subr.mxu0 0.0
    %916 = vmatpush1.msra.mxu0 0.0
    %917 = vmatprep.subr.mxu0 0.0
    %918 = vmatpush1.msra.mxu0 0.0
    %919 = vmatprep.subr.mxu0 0.0
    %920 = vmatpush1.msra.mxu0 0.0
    %921 = vmatprep.mubr.f32.mxu0 0.0
    %922 = vmatmul.mubr.f32.gmra.mrb[0].mxu0 %v779
    %v923 = vpop.f32.mrb[0].mxu0
    %v924 = vadd.f32 0.0, %v923
    %v925 = vpop.f32.mrb[0].mxu0
    %926 = vdwg.mxu0
    %v927 = vadd.f32 %v783, %v853
    %v928 = vxor.u32 %v927, 2147483648
    %v929 = vmul.f32 %v928, 1.442695
    %v930 = vpow.pop %v929
    %v931 = vadd.f32 %v930, 1.0
    %v932 = vrcp.pop %v931
    %v933 = vmul.f32 1.0, %v932
    %v934 = vadd.f32 %v784, %v855
    %v935 = vxor.u32 %v934, 2147483648
    %v936 = vmul.f32 %v935, 1.442695
    %v937 = vpow.pop %v936
    %v938 = vadd.f32 %v937, 1.0
    %v939 = vrcp.pop %v938
    %v940 = vmul.f32 1.0, %v939
    %v941 = vadd.f32 %v924, %v106
    %v942 = vmul.f32 %v933, %v941
    %v943 = vadd.f32 %v785, %v942
    %v944 = vtanh.pop %v943
    %v945 = vsub.f32 1.0, %v940
    %v946 = vmul.f32 %v945, %v944
    %v947 = vmul.f32 %v940, %v779
    %v948 = vadd.f32 %v946, %v947
    %s949 = scalar_lea.vmem [#allocation8], 32
    %950 = vst [vmem:[%s949] sm:$0xff] %v948
    %s951 = scalar_lea.vmem [#allocation3], 120
    %v952 = vld [vmem:[%s951] sm:$0xff]
    %v953 = vld [vmem:[%s951 + $0x8] sm:$0xff]
    %v954 = vld [vmem:[%s951 + $0x10] sm:$0xff]
    %955 = vmatprep.subr.mxu0 %v54
    %956 = vmatpush1.msra.mxu0 %v53
    %957 = vmatprep.subr.mxu0 %v57
    %958 = vmatpush1.msra.mxu0 %v56
    %959 = vmatprep.subr.mxu0 %v60
    %960 = vmatpush1.msra.mxu0 %v59
    %961 = vmatprep.subr.mxu0 %v63
    %962 = vmatpush1.msra.mxu0 %v62
    %963 = vmatprep.subr.mxu0 %v66
    %964 = vmatpush1.msra.mxu0 %v65
    %965 = vmatprep.subr.mxu0 %v69
    %966 = vmatpush1.msra.mxu0 %v68
    %967 = vmatprep.subr.mxu0 %v72
    %968 = vmatpush1.msra.mxu0 %v71
    %969 = vmatprep.subr.mxu0 %v75
    %970 = vmatpush1.msra.mxu0 %v74
    %971 = vmatprep.subr.mxu0 %v78
    %972 = vmatpush1.msra.mxu0 %v77
    %973 = vmatprep.subr.mxu0 %v81
    %974 = vmatpush1.msra.mxu0 %v80
    %975 = vmatprep.subr.mxu0 %v84
    %976 = vmatpush1.msra.mxu0 %v83
    %977 = vmatprep.subr.mxu0 %v87
    %978 = vmatpush1.msra.mxu0 %v86
    %979 = vmatprep.subr.mxu0 %v90
    %980 = vmatpush1.msra.mxu0 %v89
    %981 = vmatprep.subr.mxu0 %v93
    %982 = vmatpush1.msra.mxu0 %v92
    %983 = vmatprep.subr.mxu0 %v96
    %984 = vmatpush1.msra.mxu0 %v95
    %985 = vmatprep.subr.mxu0 %v99
    %986 = vmatpush1.msra.mxu0 %v98
    %987 = vmatprep.subr.mxu0 0.0
    %988 = vmatpush1.msra.mxu0 0.0
    %989 = vmatprep.subr.mxu0 0.0
    %990 = vmatpush1.msra.mxu0 0.0
    %991 = vmatprep.subr.mxu0 0.0
    %992 = vmatpush1.msra.mxu0 0.0
    %993 = vmatprep.subr.mxu0 0.0
    %994 = vmatpush1.msra.mxu0 0.0
    %995 = vmatprep.subr.mxu0 0.0
    %996 = vmatpush1.msra.mxu0 0.0
    %997 = vmatprep.subr.mxu0 0.0
    %998 = vmatpush1.msra.mxu0 0.0
    %999 = vmatprep.subr.mxu0 0.0
    %1000 = vmatpush1.msra.mxu0 0.0
    %1001 = vmatprep.subr.mxu0 0.0
    %1002 = vmatpush1.msra.mxu0 0.0
    %1003 = vmatprep.subr.mxu0 0.0
    %1004 = vmatpush1.msra.mxu0 0.0
    %1005 = vmatprep.subr.mxu0 0.0
    %1006 = vmatpush1.msra.mxu0 0.0
    %1007 = vmatprep.subr.mxu0 0.0
    %1008 = vmatpush1.msra.mxu0 0.0
    %1009 = vmatprep.subr.mxu0 0.0
    %1010 = vmatpush1.msra.mxu0 0.0
    %1011 = vmatprep.subr.mxu0 0.0
    %1012 = vmatpush1.msra.mxu0 0.0
    %1013 = vmatprep.subr.mxu0 0.0
    %1014 = vmatpush1.msra.mxu0 0.0
    %1015 = vmatprep.subr.mxu0 0.0
    %1016 = vmatpush1.msra.mxu0 0.0
    %1017 = vmatprep.subr.mxu0 0.0
    %1018 = vmatpush1.msra.mxu0 0.0
    %1019 = vmatprep.mubr.f32.mxu0 0.0
    %1020 = vmatmul.mubr.f32.gmra.mrb[0].mxu0 %v948
    %v1021 = vpop.f32.mrb[0].mxu0
    %v1022 = vadd.f32 0.0, %v1021
    %v1023 = vpop.f32.mrb[0].mxu0
    %v1024 = vadd.f32 0.0, %v1023
    %1025 = vdwg.mxu0
    %1026 = vmatprep.subr.mxu0 0.0
    %1027 = vmatpush1.msra.mxu0 %v55
    %1028 = vmatprep.subr.mxu0 0.0
    %1029 = vmatpush1.msra.mxu0 %v58
    %1030 = vmatprep.subr.mxu0 0.0
    %1031 = vmatpush1.msra.mxu0 %v61
    %1032 = vmatprep.subr.mxu0 0.0
    %1033 = vmatpush1.msra.mxu0 %v64
    %1034 = vmatprep.subr.mxu0 0.0
    %1035 = vmatpush1.msra.mxu0 %v67
    %1036 = vmatprep.subr.mxu0 0.0
    %1037 = vmatpush1.msra.mxu0 %v70
    %1038 = vmatprep.subr.mxu0 0.0
    %1039 = vmatpush1.msra.mxu0 %v73
    %1040 = vmatprep.subr.mxu0 0.0
    %1041 = vmatpush1.msra.mxu0 %v76
    %1042 = vmatprep.subr.mxu0 0.0
    %1043 = vmatpush1.msra.mxu0 %v79
    %1044 = vmatprep.subr.mxu0 0.0
    %1045 = vmatpush1.msra.mxu0 %v82
    %1046 = vmatprep.subr.mxu0 0.0
    %1047 = vmatpush1.msra.mxu0 %v85
    %1048 = vmatprep.subr.mxu0 0.0
    %1049 = vmatpush1.msra.mxu0 %v88
    %1050 = vmatprep.subr.mxu0 0.0
    %1051 = vmatpush1.msra.mxu0 %v91
    %1052 = vmatprep.subr.mxu0 0.0
    %1053 = vmatpush1.msra.mxu0 %v94
    %1054 = vmatprep.subr.mxu0 0.0
    %1055 = vmatpush1.msra.mxu0 %v97
    %1056 = vmatprep.subr.mxu0 0.0
    %1057 = vmatpush1.msra.mxu0 %v100
    %1058 = vmatprep.subr.mxu0 0.0
    %1059 = vmatpush1.msra.mxu0 0.0
    %1060 = vmatprep.subr.mxu0 0.0
    %1061 = vmatpush1.msra.mxu0 0.0
    %1062 = vmatprep.subr.mxu0 0.0
    %1063 = vmatpush1.msra.mxu0 0.0
    %1064 = vmatprep.subr.mxu0 0.0
    %1065 = vmatpush1.msra.mxu0 0.0
    %1066 = vmatprep.subr.mxu0 0.0
    %1067 = vmatpush1.msra.mxu0 0.0
    %1068 = vmatprep.subr.mxu0 0.0
    %1069 = vmatpush1.msra.mxu0 0.0
    %1070 = vmatprep.subr.mxu0 0.0
    %1071 = vmatpush1.msra.mxu0 0.0
    %1072 = vmatprep.subr.mxu0 0.0
    %1073 = vmatpush1.msra.mxu0 0.0
    %1074 = vmatprep.subr.mxu0 0.0
    %1075 = vmatpush1.msra.mxu0 0.0
    %1076 = vmatprep.subr.mxu0 0.0
    %1077 = vmatpush1.msra.mxu0 0.0
    %1078 = vmatprep.subr.mxu0 0.0
    %1079 = vmatpush1.msra.mxu0 0.0
    %1080 = vmatprep.subr.mxu0 0.0
    %1081 = vmatpush1.msra.mxu0 0.0
    %1082 = vmatprep.subr.mxu0 0.0
    %1083 = vmatpush1.msra.mxu0 0.0
    %1084 = vmatprep.subr.mxu0 0.0
    %1085 = vmatpush1.msra.mxu0 0.0
    %1086 = vmatprep.subr.mxu0 0.0
    %1087 = vmatpush1.msra.mxu0 0.0
    %1088 = vmatprep.subr.mxu0 0.0
    %1089 = vmatpush1.msra.mxu0 0.0
    %1090 = vmatprep.mubr.f32.mxu0 0.0
    %1091 = vmatmul.mubr.f32.gmra.mrb[0].mxu0 %v948
    %v1092 = vpop.f32.mrb[0].mxu0
    %v1093 = vadd.f32 0.0, %v1092
    %v1094 = vpop.f32.mrb[0].mxu0
    %1095 = vdwg.mxu0
    %v1096 = vadd.f32 %v952, %v1022
    %v1097 = vxor.u32 %v1096, 2147483648
    %v1098 = vmul.f32 %v1097, 1.442695
    %v1099 = vpow.pop %v1098
    %v1100 = vadd.f32 %v1099, 1.0
    %v1101 = vrcp.pop %v1100
    %v1102 = vmul.f32 1.0, %v1101
    %v1103 = vadd.f32 %v953, %v1024
    %v1104 = vxor.u32 %v1103, 2147483648
    %v1105 = vmul.f32 %v1104, 1.442695
    %v1106 = vpow.pop %v1105
    %v1107 = vadd.f32 %v1106, 1.0
    %v1108 = vrcp.pop %v1107
    %v1109 = vmul.f32 1.0, %v1108
    %v1110 = vadd.f32 %v1093, %v106
    %v1111 = vmul.f32 %v1102, %v1110
    %v1112 = vadd.f32 %v954, %v1111
    %v1113 = vtanh.pop %v1112
    %v1114 = vsub.f32 1.0, %v1109
    %v1115 = vmul.f32 %v1114, %v1113
    %v1116 = vmul.f32 %v1109, %v948
    %v1117 = vadd.f32 %v1115, %v1116
    %s1118 = scalar_lea.vmem [#allocation8], 40
    %1119 = vst [vmem:[%s1118] sm:$0xff] %v1117
    %s1120 = scalar_lea.vmem [#allocation3], 144
    %v1121 = vld [vmem:[%s1120] sm:$0xff]
    %v1122 = vld [vmem:[%s1120 + $0x8] sm:$0xff]
    %v1123 = vld [vmem:[%s1120 + $0x10] sm:$0xff]
    %1124 = vmatprep.subr.mxu0 %v54
    %1125 = vmatpush1.msra.mxu0 %v53
    %1126 = vmatprep.subr.mxu0 %v57
    %1127 = vmatpush1.msra.mxu0 %v56
    %1128 = vmatprep.subr.mxu0 %v60
    %1129 = vmatpush1.msra.mxu0 %v59
    %1130 = vmatprep.subr.mxu0 %v63
    %1131 = vmatpush1.msra.mxu0 %v62
    %1132 = vmatprep.subr.mxu0 %v66
    %1133 = vmatpush1.msra.mxu0 %v65
    %1134 = vmatprep.subr.mxu0 %v69
    %1135 = vmatpush1.msra.mxu0 %v68
    %1136 = vmatprep.subr.mxu0 %v72
    %1137 = vmatpush1.msra.mxu0 %v71
    %1138 = vmatprep.subr.mxu0 %v75
    %1139 = vmatpush1.msra.mxu0 %v74
    %1140 = vmatprep.subr.mxu0 %v78
    %1141 = vmatpush1.msra.mxu0 %v77
    %1142 = vmatprep.subr.mxu0 %v81
    %1143 = vmatpush1.msra.mxu0 %v80
    %1144 = vmatprep.subr.mxu0 %v84
    %1145 = vmatpush1.msra.mxu0 %v83
    %1146 = vmatprep.subr.mxu0 %v87
    %1147 = vmatpush1.msra.mxu0 %v86
    %1148 = vmatprep.subr.mxu0 %v90
    %1149 = vmatpush1.msra.mxu0 %v89
    %1150 = vmatprep.subr.mxu0 %v93
    %1151 = vmatpush1.msra.mxu0 %v92
    %1152 = vmatprep.subr.mxu0 %v96
    %1153 = vmatpush1.msra.mxu0 %v95
    %1154 = vmatprep.subr.mxu0 %v99
    %1155 = vmatpush1.msra.mxu0 %v98
    %1156 = vmatprep.subr.mxu0 0.0
    %1157 = vmatpush1.msra.mxu0 0.0
    %1158 = vmatprep.subr.mxu0 0.0
    %1159 = vmatpush1.msra.mxu0 0.0
    %1160 = vmatprep.subr.mxu0 0.0
    %1161 = vmatpush1.msra.mxu0 0.0
    %1162 = vmatprep.subr.mxu0 0.0
    %1163 = vmatpush1.msra.mxu0 0.0
    %1164 = vmatprep.subr.mxu0 0.0
    %1165 = vmatpush1.msra.mxu0 0.0
    %1166 = vmatprep.subr.mxu0 0.0
    %1167 = vmatpush1.msra.mxu0 0.0
    %1168 = vmatprep.subr.mxu0 0.0
    %1169 = vmatpush1.msra.mxu0 0.0
    %1170 = vmatprep.subr.mxu0 0.0
    %1171 = vmatpush1.msra.mxu0 0.0
    %1172 = vmatprep.subr.mxu0 0.0
    %1173 = vmatpush1.msra.mxu0 0.0
    %1174 = vmatprep.subr.mxu0 0.0
    %1175 = vmatpush1.msra.mxu0 0.0
    %1176 = vmatprep.subr.mxu0 0.0
    %1177 = vmatpush1.msra.mxu0 0.0
    %1178 = vmatprep.subr.mxu0 0.0
    %1179 = vmatpush1.msra.mxu0 0.0
    %1180 = vmatprep.subr.mxu0 0.0
    %1181 = vmatpush1.msra.mxu0 0.0
    %1182 = vmatprep.subr.mxu0 0.0
    %1183 = vmatpush1.msra.mxu0 0.0
    %1184 = vmatprep.subr.mxu0 0.0
    %1185 = vmatpush1.msra.mxu0 0.0
    %1186 = vmatprep.subr.mxu0 0.0
    %1187 = vmatpush1.msra.mxu0 0.0
    %1188 = vmatprep.mubr.f32.mxu0 0.0
    %1189 = vmatmul.mubr.f32.gmra.mrb[0].mxu0 %v1117
    %v1190 = vpop.f32.mrb[0].mxu0
    %v1191 = vadd.f32 0.0, %v1190
    %v1192 = vpop.f32.mrb[0].mxu0
    %v1193 = vadd.f32 0.0, %v1192
    %1194 = vdwg.mxu0
    %1195 = vmatprep.subr.mxu0 0.0
    %1196 = vmatpush1.msra.mxu0 %v55
    %1197 = vmatprep.subr.mxu0 0.0
    %1198 = vmatpush1.msra.mxu0 %v58
    %1199 = vmatprep.subr.mxu0 0.0
    %1200 = vmatpush1.msra.mxu0 %v61
    %1201 = vmatprep.subr.mxu0 0.0
    %1202 = vmatpush1.msra.mxu0 %v64
    %1203 = vmatprep.subr.mxu0 0.0
    %1204 = vmatpush1.msra.mxu0 %v67
    %1205 = vmatprep.subr.mxu0 0.0
    %1206 = vmatpush1.msra.mxu0 %v70
    %1207 = vmatprep.subr.mxu0 0.0
    %1208 = vmatpush1.msra.mxu0 %v73
    %1209 = vmatprep.subr.mxu0 0.0
    %1210 = vmatpush1.msra.mxu0 %v76
    %1211 = vmatprep.subr.mxu0 0.0
    %1212 = vmatpush1.msra.mxu0 %v79
    %1213 = vmatprep.subr.mxu0 0.0
    %1214 = vmatpush1.msra.mxu0 %v82
    %1215 = vmatprep.subr.mxu0 0.0
    %1216 = vmatpush1.msra.mxu0 %v85
    %1217 = vmatprep.subr.mxu0 0.0
    %1218 = vmatpush1.msra.mxu0 %v88
    %1219 = vmatprep.subr.mxu0 0.0
    %1220 = vmatpush1.msra.mxu0 %v91
    %1221 = vmatprep.subr.mxu0 0.0
    %1222 = vmatpush1.msra.mxu0 %v94
    %1223 = vmatprep.subr.mxu0 0.0
    %1224 = vmatpush1.msra.mxu0 %v97
    %1225 = vmatprep.subr.mxu0 0.0
    %1226 = vmatpush1.msra.mxu0 %v100
    %1227 = vmatprep.subr.mxu0 0.0
    %1228 = vmatpush1.msra.mxu0 0.0
    %1229 = vmatprep.subr.mxu0 0.0
    %1230 = vmatpush1.msra.mxu0 0.0
    %1231 = vmatprep.subr.mxu0 0.0
    %1232 = vmatpush1.msra.mxu0 0.0
    %1233 = vmatprep.subr.mxu0 0.0
    %1234 = vmatpush1.msra.mxu0 0.0
    %1235 = vmatprep.subr.mxu0 0.0
    %1236 = vmatpush1.msra.mxu0 0.0
    %1237 = vmatprep.subr.mxu0 0.0
    %1238 = vmatpush1.msra.mxu0 0.0
    %1239 = vmatprep.subr.mxu0 0.0
    %1240 = vmatpush1.msra.mxu0 0.0
    %1241 = vmatprep.subr.mxu0 0.0
    %1242 = vmatpush1.msra.mxu0 0.0
    %1243 = vmatprep.subr.mxu0 0.0
    %1244 = vmatpush1.msra.mxu0 0.0
    %1245 = vmatprep.subr.mxu0 0.0
    %1246 = vmatpush1.msra.mxu0 0.0
    %1247 = vmatprep.subr.mxu0 0.0
    %1248 = vmatpush1.msra.mxu0 0.0
    %1249 = vmatprep.subr.mxu0 0.0
    %1250 = vmatpush1.msra.mxu0 0.0
    %1251 = vmatprep.subr.mxu0 0.0
    %1252 = vmatpush1.msra.mxu0 0.0
    %1253 = vmatprep.subr.mxu0 0.0
    %1254 = vmatpush1.msra.mxu0 0.0
    %1255 = vmatprep.subr.mxu0 0.0
    %1256 = vmatpush1.msra.mxu0 0.0
    %1257 = vmatprep.subr.mxu0 0.0
    %1258 = vmatpush1.msra.mxu0 0.0
    %1259 = vmatprep.mubr.f32.mxu0 0.0
    %1260 = vmatmul.mubr.f32.gmra.mrb[0].mxu0 %v1117
    %v1261 = vpop.f32.mrb[0].mxu0
    %v1262 = vadd.f32 0.0, %v1261
    %v1263 = vpop.f32.mrb[0].mxu0
    %1264 = vdwg.mxu0
    %v1265 = vadd.f32 %v1121, %v1191
    %v1266 = vxor.u32 %v1265, 2147483648
    %v1267 = vmul.f32 %v1266, 1.442695
    %v1268 = vpow.pop %v1267
    %v1269 = vadd.f32 %v1268, 1.0
    %v1270 = vrcp.pop %v1269
    %v1271 = vmul.f32 1.0, %v1270
    %v1272 = vadd.f32 %v1122, %v1193
    %v1273 = vxor.u32 %v1272, 2147483648
    %v1274 = vmul.f32 %v1273, 1.442695
    %v1275 = vpow.pop %v1274
    %v1276 = vadd.f32 %v1275, 1.0
    %v1277 = vrcp.pop %v1276
    %v1278 = vmul.f32 1.0, %v1277
    %v1279 = vadd.f32 %v1262, %v106
    %v1280 = vmul.f32 %v1271, %v1279
    %v1281 = vadd.f32 %v1123, %v1280
    %v1282 = vtanh.pop %v1281
    %v1283 = vsub.f32 1.0, %v1278
    %v1284 = vmul.f32 %v1283, %v1282
    %v1285 = vmul.f32 %v1278, %v1117
    %v1286 = vadd.f32 %v1284, %v1285
    %s1287 = scalar_lea.vmem [#allocation8], 48
    %1288 = vst [vmem:[%s1287] sm:$0xff] %v1286
    %s1289 = scalar_lea.vmem [#allocation3], 168
    %v1290 = vld [vmem:[%s1289] sm:$0xff]
    %v1291 = vld [vmem:[%s1289 + $0x8] sm:$0xff]
    %v1292 = vld [vmem:[%s1289 + $0x10] sm:$0xff]
    %1293 = vmatprep.subr.mxu0 %v54
    %1294 = vmatpush1.msra.mxu0 %v53
    %1295 = vmatprep.subr.mxu0 %v57
    %1296 = vmatpush1.msra.mxu0 %v56
    %1297 = vmatprep.subr.mxu0 %v60
    %1298 = vmatpush1.msra.mxu0 %v59
    %1299 = vmatprep.subr.mxu0 %v63
    %1300 = vmatpush1.msra.mxu0 %v62
    %1301 = vmatprep.subr.mxu0 %v66
    %1302 = vmatpush1.msra.mxu0 %v65
    %1303 = vmatprep.subr.mxu0 %v69
    %1304 = vmatpush1.msra.mxu0 %v68
    %1305 = vmatprep.subr.mxu0 %v72
    %1306 = vmatpush1.msra.mxu0 %v71
    %1307 = vmatprep.subr.mxu0 %v75
    %1308 = vmatpush1.msra.mxu0 %v74
    %1309 = vmatprep.subr.mxu0 %v78
    %1310 = vmatpush1.msra.mxu0 %v77
    %1311 = vmatprep.subr.mxu0 %v81
    %1312 = vmatpush1.msra.mxu0 %v80
    %1313 = vmatprep.subr.mxu0 %v84
    %1314 = vmatpush1.msra.mxu0 %v83
    %1315 = vmatprep.subr.mxu0 %v87
    %1316 = vmatpush1.msra.mxu0 %v86
    %1317 = vmatprep.subr.mxu0 %v90
    %1318 = vmatpush1.msra.mxu0 %v89
    %1319 = vmatprep.subr.mxu0 %v93
    %1320 = vmatpush1.msra.mxu0 %v92
    %1321 = vmatprep.subr.mxu0 %v96
    %1322 = vmatpush1.msra.mxu0 %v95
    %1323 = vmatprep.subr.mxu0 %v99
    %1324 = vmatpush1.msra.mxu0 %v98
    %1325 = vmatprep.subr.mxu0 0.0
    %1326 = vmatpush1.msra.mxu0 0.0
    %1327 = vmatprep.subr.mxu0 0.0
    %1328 = vmatpush1.msra.mxu0 0.0
    %1329 = vmatprep.subr.mxu0 0.0
    %1330 = vmatpush1.msra.mxu0 0.0
    %1331 = vmatprep.subr.mxu0 0.0
    %1332 = vmatpush1.msra.mxu0 0.0
    %1333 = vmatprep.subr.mxu0 0.0
    %1334 = vmatpush1.msra.mxu0 0.0
    %1335 = vmatprep.subr.mxu0 0.0
    %1336 = vmatpush1.msra.mxu0 0.0
    %1337 = vmatprep.subr.mxu0 0.0
    %1338 = vmatpush1.msra.mxu0 0.0
    %1339 = vmatprep.subr.mxu0 0.0
    %1340 = vmatpush1.msra.mxu0 0.0
    %1341 = vmatprep.subr.mxu0 0.0
    %1342 = vmatpush1.msra.mxu0 0.0
    %1343 = vmatprep.subr.mxu0 0.0
    %1344 = vmatpush1.msra.mxu0 0.0
    %1345 = vmatprep.subr.mxu0 0.0
    %1346 = vmatpush1.msra.mxu0 0.0
    %1347 = vmatprep.subr.mxu0 0.0
    %1348 = vmatpush1.msra.mxu0 0.0
    %1349 = vmatprep.subr.mxu0 0.0
    %1350 = vmatpush1.msra.mxu0 0.0
    %1351 = vmatprep.subr.mxu0 0.0
    %1352 = vmatpush1.msra.mxu0 0.0
    %1353 = vmatprep.subr.mxu0 0.0
    %1354 = vmatpush1.msra.mxu0 0.0
    %1355 = vmatprep.subr.mxu0 0.0
    %1356 = vmatpush1.msra.mxu0 0.0
    %1357 = vmatprep.mubr.f32.mxu0 0.0
    %1358 = vmatmul.mubr.f32.gmra.mrb[0].mxu0 %v1286
    %v1359 = vpop.f32.mrb[0].mxu0
    %v1360 = vadd.f32 0.0, %v1359
    %v1361 = vpop.f32.mrb[0].mxu0
    %v1362 = vadd.f32 0.0, %v1361
    %1363 = vdwg.mxu0
    %1364 = vmatprep.subr.mxu0 0.0
    %1365 = vmatpush1.msra.mxu0 %v55
    %1366 = vmatprep.subr.mxu0 0.0
    %1367 = vmatpush1.msra.mxu0 %v58
    %1368 = vmatprep.subr.mxu0 0.0
    %1369 = vmatpush1.msra.mxu0 %v61
    %1370 = vmatprep.subr.mxu0 0.0
    %1371 = vmatpush1.msra.mxu0 %v64
    %1372 = vmatprep.subr.mxu0 0.0
    %1373 = vmatpush1.msra.mxu0 %v67
    %1374 = vmatprep.subr.mxu0 0.0
    %1375 = vmatpush1.msra.mxu0 %v70
    %1376 = vmatprep.subr.mxu0 0.0
    %1377 = vmatpush1.msra.mxu0 %v73
    %1378 = vmatprep.subr.mxu0 0.0
    %1379 = vmatpush1.msra.mxu0 %v76
    %1380 = vmatprep.subr.mxu0 0.0
    %1381 = vmatpush1.msra.mxu0 %v79
    %1382 = vmatprep.subr.mxu0 0.0
    %1383 = vmatpush1.msra.mxu0 %v82
    %1384 = vmatprep.subr.mxu0 0.0
    %1385 = vmatpush1.msra.mxu0 %v85
    %1386 = vmatprep.subr.mxu0 0.0
    %1387 = vmatpush1.msra.mxu0 %v88
    %1388 = vmatprep.subr.mxu0 0.0
    %1389 = vmatpush1.msra.mxu0 %v91
    %1390 = vmatprep.subr.mxu0 0.0
    %1391 = vmatpush1.msra.mxu0 %v94
    %1392 = vmatprep.subr.mxu0 0.0
    %1393 = vmatpush1.msra.mxu0 %v97
    %1394 = vmatprep.subr.mxu0 0.0
    %1395 = vmatpush1.msra.mxu0 %v100
    %1396 = vmatprep.subr.mxu0 0.0
    %1397 = vmatpush1.msra.mxu0 0.0
    %1398 = vmatprep.subr.mxu0 0.0
    %1399 = vmatpush1.msra.mxu0 0.0
    %1400 = vmatprep.subr.mxu0 0.0
    %1401 = vmatpush1.msra.mxu0 0.0
    %1402 = vmatprep.subr.mxu0 0.0
    %1403 = vmatpush1.msra.mxu0 0.0
    %1404 = vmatprep.subr.mxu0 0.0
    %1405 = vmatpush1.msra.mxu0 0.0
    %1406 = vmatprep.subr.mxu0 0.0
    %1407 = vmatpush1.msra.mxu0 0.0
    %1408 = vmatprep.subr.mxu0 0.0
    %1409 = vmatpush1.msra.mxu0 0.0
    %1410 = vmatprep.subr.mxu0 0.0
    %1411 = vmatpush1.msra.mxu0 0.0
    %1412 = vmatprep.subr.mxu0 0.0
    %1413 = vmatpush1.msra.mxu0 0.0
    %1414 = vmatprep.subr.mxu0 0.0
    %1415 = vmatpush1.msra.mxu0 0.0
    %1416 = vmatprep.subr.mxu0 0.0
    %1417 = vmatpush1.msra.mxu0 0.0
    %1418 = vmatprep.subr.mxu0 0.0
    %1419 = vmatpush1.msra.mxu0 0.0
    %1420 = vmatprep.subr.mxu0 0.0
    %1421 = vmatpush1.msra.mxu0 0.0
    %1422 = vmatprep.subr.mxu0 0.0
    %1423 = vmatpush1.msra.mxu0 0.0
    %1424 = vmatprep.subr.mxu0 0.0
    %1425 = vmatpush1.msra.mxu0 0.0
    %1426 = vmatprep.subr.mxu0 0.0
    %1427 = vmatpush1.msra.mxu0 0.0
    %1428 = vmatprep.mubr.f32.mxu0 0.0
    %1429 = vmatmul.mubr.f32.gmra.mrb[0].mxu0 %v1286
    %v1430 = vpop.f32.mrb[0].mxu0
    %v1431 = vadd.f32 0.0, %v1430
    %v1432 = vpop.f32.mrb[0].mxu0
    %1433 = vdwg.mxu0
    %v1434 = vadd.f32 %v1290, %v1360
    %v1435 = vxor.u32 %v1434, 2147483648
    %v1436 = vmul.f32 %v1435, 1.442695
    %v1437 = vpow.pop %v1436
    %v1438 = vadd.f32 %v1437, 1.0
    %v1439 = vrcp.pop %v1438
    %v1440 = vmul.f32 1.0, %v1439
    %v1441 = vadd.f32 %v1291, %v1362
    %v1442 = vxor.u32 %v1441, 2147483648
    %v1443 = vmul.f32 %v1442, 1.442695
    %v1444 = vpow.pop %v1443
    %v1445 = vadd.f32 %v1444, 1.0
    %v1446 = vrcp.pop %v1445
    %v1447 = vmul.f32 1.0, %v1446
    %v1448 = vadd.f32 %v1431, %v106
    %v1449 = vmul.f32 %v1440, %v1448
    %v1450 = vadd.f32 %v1292, %v1449
    %v1451 = vtanh.pop %v1450
    %v1452 = vsub.f32 1.0, %v1447
    %v1453 = vmul.f32 %v1452, %v1451
    %v1454 = vmul.f32 %v1447, %v1286
    %v1455 = vadd.f32 %v1453, %v1454
    %s1456 = scalar_lea.vmem [#allocation8], 56
    %1457 = vst [vmem:[%s1456] sm:$0xff] %v1455
    %1458 = vst [vmem:[#allocation2] sm:$0xff] %v1455
    // Predicated region
    $region30: #{tpu_custom_call.1} parent=1 // pred_check
      _
    $region31: #{tpu_custom_call.1} parent=1 // pred_check_branch
      %1460 = sbr.rel (0) target = $region33
    $region32: #{tpu_custom_call.1} parent=1 // pred_region
      %s1462 = ssub.s32 1024, 1024
      %1463 = vsyncadd [#allocation5], %s1462
      %s1464 = sshll.u32 [#allocation8], 4
      %s1465 = int_to_ptr.vmem [resolvable:$true] %s1464
      %1470 = dma.vmem_to_hbm [thread:$0]  %s1465, 1024, %s4, [#allocation5], 128, 128, 8
    $region33: #{tpu_custom_call.1} parent=1 // pred_fallthru
      _
    // Predicated region
    $region34: #{tpu_custom_call.1} parent=1 // pred_check
      _
    $region35: #{tpu_custom_call.1} parent=1 // pred_check_branch
      %1472 = sbr.rel (0) target = $region37
    $region36: #{tpu_custom_call.1} parent=1 // pred_region
      %1473 = dma.done [#allocation5], 1024
    $region37: #{tpu_custom_call.1} parent=1 // pred_fallthru
      _
    %1474 = vsyncpa [#allocation4], 1
    %1475 = vsyncpa [#allocation7], 1
    %1476 = vsyncpa [#allocation5], 1

</llo_original>
